<compile_context>
chip_gen: v7x
topology: tpu7x:2x2x1
jax: 0.10.0
libtpu: 0.0.40
codegen_flags: <defaults>
</compile_context>

<pallas_src>
import math
import jax
import jax.numpy as jnp
from jax.experimental import pallas as pl
from jax.experimental.pallas import tpu as pltpu

# ---------------- model config (small, consistent with the module) ----------------
B = 2            # batch
S = 8            # sequence length
H = 32           # hidden_size
NH = 4           # attention heads
DK = H // NH     # head dim
FF = 64          # feed-forward inner dim
NP = 8           # number of paths
PLEN = 4         # path length
NET = 5          # number of edge types
EPS = 1e-5       # LayerNorm eps (PyTorch default)

BS = B * S               # 16 rows processed together
NTOK = B * NP * PLEN     # 64 path tokens
NPATHS = B * NP          # 16 paths


# ---------------- fused kernel: attn sublayer + FFN sublayer + path embedding ----------------
def encoder_layer_kernel(x_ref, am_ref, wattn_ref, battn_ref, vecs_ref,
                         w1_ref, b1_ref, w2_ref, wp_ref,
                         idx_ref, ep_ref, pw_ref,
                         xo_ref, pe_ref):
    f32 = jnp.float32
    x = x_ref[...]                                   # (BS, H)

    ln1_g = vecs_ref[0:1, :]
    ln1_b = vecs_ref[1:2, :]
    ln2_g = vecs_ref[2:3, :]
    ln2_b = vecs_ref[3:4, :]
    b2    = vecs_ref[4:5, :]
    bp    = vecs_ref[5:6, :]

    # ------------- sublayer 0: x1 = x + MHA(LN(x), bias, mask) -------------
    mu = jnp.mean(x, axis=-1, keepdims=True)
    var = jnp.mean((x - mu) ** 2, axis=-1, keepdims=True)
    xn = (x - mu) * jax.lax.rsqrt(var + EPS) * ln1_g + ln1_b

    wqkv = wattn_ref[:, :3 * H]                      # (H, 3H)
    wo   = wattn_ref[:, 3 * H:]                      # (H, H)
    bqkv = battn_ref[:, :3 * H]                      # (1, 3H)
    bo   = battn_ref[:, 3 * H:]                      # (1, H)

    qkv = jnp.dot(xn, wqkv, preferred_element_type=f32) + bqkv       # fused QKV (BS, 3H)
    scale = 1.0 / math.sqrt(DK)
    q = qkv[:, 0:H] * scale                          # fold softmax scale once into q
    k = qkv[:, H:2 * H]
    v = qkv[:, 2 * H:3 * H]

    proj = jnp.zeros((BS, H), f32)
    for h in range(NH):                              # static unroll; everything stays in vregs
        lo = h * DK
        qh = q[:, lo:lo + DK]                        # (BS, DK)
        kh = k[:, lo:lo + DK]
        vh = v[:, lo:lo + DK]
        # q @ k^T over the whole batch at once; cross-batch and masked positions carry an
        # additive -1e9 in am_ref, so they underflow to 0 after softmax.
        s = jax.lax.dot_general(qh, kh, (((1,), (1,)), ((), ())),
                                preferred_element_type=f32)          # (BS, BS)
        s = s + am_ref[h]                            # bias + mask + block-diag, pre-combined
        s = s - jnp.max(s, axis=-1, keepdims=True)
        p = jnp.exp(s)
        p = p * pl.reciprocal(jnp.sum(p, axis=-1, keepdims=True), approx=True)
        ctx = jnp.dot(p, vh, preferred_element_type=f32)             # (BS, DK), stays in vregs
        proj = proj + jnp.dot(ctx, wo[lo:lo + DK, :], preferred_element_type=f32)
    x1 = x + proj + bo                               # residual (dropout identity in eval)

    # ------------- sublayer 1: x2 = x1 + FFN(LN(x1)) -------------
    mu2 = jnp.mean(x1, axis=-1, keepdims=True)
    var2 = jnp.mean((x1 - mu2) ** 2, axis=-1, keepdims=True)
    xn2 = (x1 - mu2) * jax.lax.rsqrt(var2 + EPS) * ln2_g + ln2_b
    hdn = jnp.maximum(jnp.dot(xn2, w1_ref[...], preferred_element_type=f32) + b1_ref[...], 0.0)
    x2 = x1 + jnp.dot(hdn, w2_ref[...], preferred_element_type=f32) + b2
    xo_ref[...] = x2

    # ------------- path embedding (x2 still resident in vregs) -------------
    # gather x2 rows with a one-hot MXU matmul (flat indices b*S + node)
    col = jax.lax.broadcasted_iota(jnp.int32, (NTOK, BS), 1)
    onehot = (idx_ref[...] == col).astype(f32)                        # (NTOK, BS)
    gathered = jnp.dot(onehot, x2, preferred_element_type=f32)        # (NTOK, H)
    feats = gathered + ep_ref[...]                                    # + edge/pos embeddings

    # weighted mean-pool of PLEN tokens per path via one static pooling matmul
    prow = jax.lax.broadcasted_iota(jnp.int32, (NPATHS, NTOK), 0)
    pcol = jax.lax.broadcasted_iota(jnp.int32, (NPATHS, NTOK), 1)
    inpath = (pcol >= prow * PLEN) & (pcol < (prow + 1) * PLEN)
    pool = jnp.where(inpath, 1.0 / PLEN, 0.0) * pw_ref[...]           # path_weight folded in
    pooled = jnp.dot(pool, feats, preferred_element_type=f32)         # (NPATHS, H)
    pe_ref[...] = jnp.dot(pooled, wp_ref[...], preferred_element_type=f32) + bp


# ---------------- wrapper ----------------
def _full_spec(shape):
    nd = len(shape)
    return pl.BlockSpec(shape, lambda i, _nd=nd: (0,) * _nd)


def _block_diag_neg(t):
    """(NH, B, S, S) -> (NH, B*S, B*S): per-batch blocks on the diagonal, -1e9 elsewhere."""
    out = jnp.full((NH, BS, BS), -1e9, jnp.float32)
    for b in range(B):
        out = out.at[:, b * S:(b + 1) * S, b * S:(b + 1) * S].set(t[:, b])
    return out


@jax.jit
def _forward_impl(x, bias, mask, path_index, path_edge_type, path_positions, path_weight, p):
    # ---- wrapper-side glue: operand packing / embedding lookups (layout only) ----
    x2d = x.reshape(BS, H)

    # combine additive bias + masked_fill(-1e9) + cross-batch block mask into ONE operand
    addm = jnp.where(mask > 0, bias, -1e9)                                    # (B, NH, S, S)
    am = _block_diag_neg(jnp.transpose(addm, (1, 0, 2, 3)))                   # (NH, BS, BS)

    w_attn = jnp.concatenate([p["wq"], p["wk"], p["wv"], p["wo"]], axis=1)    # (H, 4H) lane-dense
    b_attn = jnp.concatenate([p["bq"], p["bk"], p["bv"], p["bo"]], axis=1)    # (1, 4H)
    zeros = jnp.zeros((1, H), jnp.float32)
    vecs = jnp.concatenate([p["ln1_g"], p["ln1_b"], p["ln2_g"], p["ln2_b"],
                            p["b2"], p["bp"], zeros, zeros], axis=0)          # (8, H)

    # path glue: flat row indices into x2d, and x2-independent edge/pos embedding sum
    flat_idx = (jnp.arange(B, dtype=jnp.int32)[:, None, None] * S
                + path_index.astype(jnp.int32)).reshape(NTOK, 1)
    ep = (p["edge_emb"][path_edge_type] + p["pos_emb"][path_positions]).reshape(NTOK, H)
    pw = path_weight.reshape(NPATHS, 1).astype(jnp.float32)

    in_specs = [
        _full_spec((BS, H)),                 # x
        _full_spec((NH, BS, BS)),            # combined additive bias/mask (block-diagonal)
        _full_spec((H, 4 * H)),              # [wq|wk|wv|wo]
        _full_spec((1, 4 * H)),              # [bq|bk|bv|bo]
        _full_spec((8, H)),                  # [ln1_g, ln1_b, ln2_g, ln2_b, b2, bp, 0, 0]
        _full_spec((H, FF)),                 # w1
        _full_spec((1, FF)),                 # b1
        _full_spec((FF, H)),                 # w2
        _full_spec((H, H)),                  # wp
        _full_spec((NTOK, 1)),               # flat path-row indices (int32)
        _full_spec((NTOK, H)),               # edge+pos embeddings
        _full_spec((NPATHS, 1)),             # path weights
    ]
    x2_flat, pe_flat = pl.pallas_call(
        encoder_layer_kernel,
        out_shape=(jax.ShapeDtypeStruct((BS, H), jnp.float32),
                   jax.ShapeDtypeStruct((NPATHS, H), jnp.float32)),
        grid_spec=pltpu.PrefetchScalarGridSpec(
            num_scalar_prefetch=0, grid=(1,),
            in_specs=in_specs,
            out_specs=[_full_spec((BS, H)), _full_spec((NPATHS, H))]),
        compiler_params=pltpu.CompilerParams(dimension_semantics=("arbitrary",)),
    )(x2d, am, w_attn, b_attn, vecs, p["w1"], p["b1"], p["w2"], p["wp"], flat_idx, ep, pw)
    return x2_flat.reshape(B, S, H), pe_flat.reshape(B, NP, H)


def encoder_layer(x, bias, mask, path_list, path_index, path_edge_type,
                  path_positions, path_weight, params):
    # path_list is an opaque Python list in the original module; not used numerically.
    del path_list
    return _forward_impl(x, bias, mask, path_index, path_edge_type, path_positions,
                         path_weight, params)


# ---------------- pure-JAX reference (for correctness check) ----------------
def _reference_forward(x, bias, mask, path_index, path_edge_type, path_positions, path_weight, p):
    def ln(t, g, b):
        mu = t.mean(-1, keepdims=True)
        var = ((t - mu) ** 2).mean(-1, keepdims=True)
        return (t - mu) * jax.lax.rsqrt(var + EPS) * g + b

    xn = ln(x, p["ln1_g"], p["ln1_b"])
    q = xn @ p["wq"] + p["bq"]
    k = xn @ p["wk"] + p["bk"]
    v = xn @ p["wv"] + p["bv"]
    split = lambda t: t.reshape(B, S, NH, DK).transpose(0, 2, 1, 3)
    qh, kh, vh = split(q), split(k), split(v)
    s = jnp.einsum('bhqd,bhkd->bhqk', qh, kh) / math.sqrt(DK) + bias
    s = jnp.where(mask > 0, s, -1e9)
    a = jax.nn.softmax(s, axis=-1)
    ctx = jnp.einsum('bhqk,bhkd->bhqd', a, vh).transpose(0, 2, 1, 3).reshape(B, S, H)
    x1 = x + ctx @ p["wo"] + p["bo"]
    xn2 = ln(x1, p["ln2_g"], p["ln2_b"])
    x2 = x1 + jnp.maximum(xn2 @ p["w1"] + p["b1"], 0.0) @ p["w2"] + p["b2"]
    gathered = jax.vmap(lambda xb, idx: xb[idx])(x2, path_index)
    feats = gathered + p["edge_emb"][path_edge_type] + p["pos_emb"][path_positions]
    pooled = feats.mean(axis=2) * path_weight[..., None]
    return x2, pooled @ p["wp"] + p["bp"]


# ---------------- deterministic parameter init ----------------
def init_params(key):
    ks = jax.random.split(key, 16)
    n = lambda k, shape, scale: (jax.random.normal(k, shape, jnp.float32) * scale)
    return {
        "ln1_g": jnp.ones((1, H), jnp.float32), "ln1_b": jnp.zeros((1, H), jnp.float32),
        "ln2_g": jnp.ones((1, H), jnp.float32), "ln2_b": jnp.zeros((1, H), jnp.float32),
        "wq": n(ks[0], (H, H), 0.1), "bq": jnp.zeros((1, H), jnp.float32),
        "wk": n(ks[1], (H, H), 0.1), "bk": jnp.zeros((1, H), jnp.float32),
        "wv": n(ks[2], (H, H), 0.1), "bv": jnp.zeros((1, H), jnp.float32),
        "wo": n(ks[3], (H, H), 0.1), "bo": jnp.zeros((1, H), jnp.float32),
        "w1": n(ks[4], (H, FF), 0.1), "b1": jnp.zeros((1, FF), jnp.float32),
        "w2": n(ks[5], (FF, H), 0.1), "b2": jnp.zeros((1, H), jnp.float32),
        "wp": n(ks[6], (H, H), 0.1), "bp": jnp.zeros((1, H), jnp.float32),
        "edge_emb": n(ks[7], (NET, H), 0.1),
        "pos_emb": n(ks[8], (PLEN, H), 0.1),
    }


# TODO(synk): self_attn / feed_forward / path_embedding_layer are injected nn.Modules in the
# reference; canonical MHA / 2-layer-FFN / gather-pool-project implementations are assumed.

if __name__ == "__main__":
    key = jax.random.PRNGKey(0)
    k_p, k_x, k_b, k_i, k_e, k_w = jax.random.split(key, 6)

    params = init_params(k_p)

    x = jax.random.normal(k_x, (B, S, H), jnp.float32)
    bias = jax.random.normal(k_b, (B, NH, S, S), jnp.float32) * 0.1
    mask = jnp.ones((B, 1, S, S), jnp.float32)                     # 1 = attend
    path_list = []                                                 # opaque, unused numerically
    path_index = jax.random.randint(k_i, (B, NP, PLEN), 0, S)
    path_edge_type = jax.random.randint(k_e, (B, NP, PLEN), 0, NET)
    path_positions = jnp.broadcast_to(jnp.arange(PLEN), (B, NP, PLEN))
    path_weight = jax.nn.softmax(jax.random.normal(k_w, (B, NP), jnp.float32), axis=-1)

    x_out, path_emb = encoder_layer(
        x, bias, mask, path_list, path_index, path_edge_type, path_positions, path_weight, params)
    jax.block_until_ready((x_out, path_emb))

    assert x_out.shape == (B, S, H) and path_emb.shape == (B, NP, H)
    assert bool(jnp.all(jnp.isfinite(x_out))) and bool(jnp.all(jnp.isfinite(path_emb)))

    x_expect, pe_expect = _reference_forward(
        x, bias, mask, path_index, path_edge_type, path_positions, path_weight, params)
    assert jnp.allclose(x_out, x_expect, rtol=2e-2, atol=2e-2)
    assert jnp.allclose(path_emb, pe_expect, rtol=2e-2, atol=2e-2)
    print("KERNEL_OK")
</pallas_src>

<mosaic_0001>
module attributes {stable_mosaic.version = 11 : i64} {
  func.func @encoder_layer_kernel(%arg0: i32, %arg1: memref<16x32xf32, #tpu.memory_space<vmem>>, %arg2: memref<4x16x16xf32, #tpu.memory_space<vmem>>, %arg3: memref<32x128xf32, #tpu.memory_space<vmem>>, %arg4: memref<1x128xf32, #tpu.memory_space<vmem>>, %arg5: memref<8x32xf32, #tpu.memory_space<vmem>>, %arg6: memref<32x64xf32, #tpu.memory_space<vmem>>, %arg7: memref<1x64xf32, #tpu.memory_space<vmem>>, %arg8: memref<64x32xf32, #tpu.memory_space<vmem>>, %arg9: memref<32x32xf32, #tpu.memory_space<vmem>>, %arg10: memref<64x1xi32, #tpu.memory_space<vmem>>, %arg11: memref<64x32xf32, #tpu.memory_space<vmem>>, %arg12: memref<16x1xf32, #tpu.memory_space<vmem>>, %arg13: memref<16x32xf32, #tpu.memory_space<vmem>>, %arg14: memref<16x32xf32, #tpu.memory_space<vmem>>) attributes {dimension_semantics = [#tpu.dimension_semantics<arbitrary>], iteration_bounds = array<i64: 1>, scalar_prefetch = 0 : i64, scratch_operands = 0 : i64, tpu.core_type = #tpu.core_type<tc>, window_params = [{pipeline_mode = #tpu.pipeline_mode<synchronous>, transform_indices = @transform_0, window_bounds = array<i64: 16, 32>}, {pipeline_mode = #tpu.pipeline_mode<synchronous>, transform_indices = @transform_1, window_bounds = array<i64: 4, 16, 16>}, {pipeline_mode = #tpu.pipeline_mode<synchronous>, transform_indices = @transform_2, window_bounds = array<i64: 32, 128>}, {pipeline_mode = #tpu.pipeline_mode<synchronous>, transform_indices = @transform_3, window_bounds = array<i64: 1, 128>}, {pipeline_mode = #tpu.pipeline_mode<synchronous>, transform_indices = @transform_4, window_bounds = array<i64: 8, 32>}, {pipeline_mode = #tpu.pipeline_mode<synchronous>, transform_indices = @transform_5, window_bounds = array<i64: 32, 64>}, {pipeline_mode = #tpu.pipeline_mode<synchronous>, transform_indices = @transform_6, window_bounds = array<i64: 1, 64>}, {pipeline_mode = #tpu.pipeline_mode<synchronous>, transform_indices = @transform_7, window_bounds = array<i64: 64, 32>}, {pipeline_mode = #tpu.pipeline_mode<synchronous>, transform_indices = @transform_8, window_bounds = array<i64: 32, 32>}, {pipeline_mode = #tpu.pipeline_mode<synchronous>, transform_indices = @transform_9, window_bounds = array<i64: 64, 1>}, {pipeline_mode = #tpu.pipeline_mode<synchronous>, transform_indices = @transform_10, window_bounds = array<i64: 64, 32>}, {pipeline_mode = #tpu.pipeline_mode<synchronous>, transform_indices = @transform_11, window_bounds = array<i64: 16, 1>}, {pipeline_mode = #tpu.pipeline_mode<synchronous>, transform_indices = @transform_12, window_bounds = array<i64: 16, 32>}, {pipeline_mode = #tpu.pipeline_mode<synchronous>, transform_indices = @transform_13, window_bounds = array<i64: 16, 32>}]} {
    %c0 = arith.constant 0 : index
    %c0_0 = arith.constant 0 : index
    %0 = vector.load %arg1[%c0, %c0_0] : memref<16x32xf32, #tpu.memory_space<vmem>>, vector<16x32xf32>
    %c0_1 = arith.constant 0 : index
    %c0_2 = arith.constant 0 : index
    %1 = vector.load %arg5[%c0_1, %c0_2] : memref<8x32xf32, #tpu.memory_space<vmem>>, vector<1x32xf32>
    %c1 = arith.constant 1 : index
    %c0_3 = arith.constant 0 : index
    %2 = vector.load %arg5[%c1, %c0_3] : memref<8x32xf32, #tpu.memory_space<vmem>>, vector<1x32xf32>
    %c2 = arith.constant 2 : index
    %c0_4 = arith.constant 0 : index
    %3 = vector.load %arg5[%c2, %c0_4] : memref<8x32xf32, #tpu.memory_space<vmem>>, vector<1x32xf32>
    %c3 = arith.constant 3 : index
    %c0_5 = arith.constant 0 : index
    %4 = vector.load %arg5[%c3, %c0_5] : memref<8x32xf32, #tpu.memory_space<vmem>>, vector<1x32xf32>
    %c4 = arith.constant 4 : index
    %c0_6 = arith.constant 0 : index
    %5 = vector.load %arg5[%c4, %c0_6] : memref<8x32xf32, #tpu.memory_space<vmem>>, vector<1x32xf32>
    %c5 = arith.constant 5 : index
    %c0_7 = arith.constant 0 : index
    %6 = vector.load %arg5[%c5, %c0_7] : memref<8x32xf32, #tpu.memory_space<vmem>>, vector<1x32xf32>
    %cst = arith.constant dense<0.000000e+00> : vector<16xf32>
    %7 = vector.multi_reduction <add>, %0, %cst [1] : vector<16x32xf32> to vector<16xf32>
    %8 = vector.shape_cast %7 : vector<16xf32> to vector<16x1xf32>
    %cst_8 = arith.constant 3.200000e+01 : f32
    %9 = vector.broadcast %cst_8 : f32 to vector<16x1xf32>
    %10 = arith.divf %8, %9 : vector<16x1xf32>
    %11 = vector.broadcast %10 : vector<16x1xf32> to vector<16x32xf32>
    %12 = arith.subf %0, %11 : vector<16x32xf32>
    %13 = arith.mulf %12, %12 : vector<16x32xf32>
    %cst_9 = arith.constant dense<0.000000e+00> : vector<16xf32>
    %14 = vector.multi_reduction <add>, %13, %cst_9 [1] : vector<16x32xf32> to vector<16xf32>
    %15 = vector.shape_cast %14 : vector<16xf32> to vector<16x1xf32>
    %cst_10 = arith.constant 3.200000e+01 : f32
    %16 = vector.broadcast %cst_10 : f32 to vector<16x1xf32>
    %17 = arith.divf %15, %16 : vector<16x1xf32>
    %18 = vector.broadcast %10 : vector<16x1xf32> to vector<16x32xf32>
    %19 = arith.subf %0, %18 : vector<16x32xf32>
    %cst_11 = arith.constant 9.99999974E-6 : f32
    %20 = vector.broadcast %cst_11 : f32 to vector<16x1xf32>
    %21 = arith.addf %17, %20 : vector<16x1xf32>
    %22 = math.rsqrt %21 : vector<16x1xf32>
    %23 = vector.broadcast %22 : vector<16x1xf32> to vector<16x32xf32>
    %24 = arith.mulf %19, %23 : vector<16x32xf32>
    %25 = vector.broadcast %1 : vector<1x32xf32> to vector<16x32xf32>
    %26 = arith.mulf %24, %25 : vector<16x32xf32>
    %27 = vector.broadcast %2 : vector<1x32xf32> to vector<16x32xf32>
    %28 = arith.addf %26, %27 : vector<16x32xf32>
    %c0_12 = arith.constant 0 : index
    %c0_13 = arith.constant 0 : index
    %29 = vector.load %arg3[%c0_12, %c0_13] : memref<32x128xf32, #tpu.memory_space<vmem>>, vector<32x96xf32>
    %c0_14 = arith.constant 0 : index
    %c96 = arith.constant 96 : index
    %30 = vector.load %arg3[%c0_14, %c96] : memref<32x128xf32, #tpu.memory_space<vmem>>, vector<32x32xf32>
    %c0_15 = arith.constant 0 : index
    %c0_16 = arith.constant 0 : index
    %31 = vector.load %arg4[%c0_15, %c0_16] : memref<1x128xf32, #tpu.memory_space<vmem>>, vector<1x96xf32>
    %c0_17 = arith.constant 0 : index
    %c96_18 = arith.constant 96 : index
    %32 = vector.load %arg4[%c0_17, %c96_18] : memref<1x128xf32, #tpu.memory_space<vmem>>, vector<1x32xf32>
    %cst_19 = arith.constant dense<0.000000e+00> : vector<16x96xf32>
    %33 = tpu.matmul %28, %29, %cst_19 {dimension_numbers = #tpu.dot_dimension_numbers<[1], [0], [0], [1], [0, 0, 1, 1], [], []>} : vector<16x32xf32>, vector<32x96xf32>, vector<16x96xf32> -> vector<16x96xf32>
    %34 = vector.broadcast %31 : vector<1x96xf32> to vector<16x96xf32>
    %35 = arith.addf %33, %34 : vector<16x96xf32>
    %36 = vector.extract_strided_slice %35 {offsets = [0, 0], sizes = [16, 32], strides = [1, 1]} : vector<16x96xf32> to vector<16x32xf32>
    %cst_20 = arith.constant 0.353553385 : f32
    %37 = vector.broadcast %cst_20 : f32 to vector<16x32xf32>
    %38 = arith.mulf %36, %37 : vector<16x32xf32>
    %39 = vector.extract_strided_slice %35 {offsets = [0, 32], sizes = [16, 32], strides = [1, 1]} : vector<16x96xf32> to vector<16x32xf32>
    %40 = vector.extract_strided_slice %35 {offsets = [0, 64], sizes = [16, 32], strides = [1, 1]} : vector<16x96xf32> to vector<16x32xf32>
    %cst_21 = arith.constant 0.000000e+00 : f32
    %41 = vector.broadcast %cst_21 : f32 to vector<16x32xf32>
    %42 = vector.extract_strided_slice %38 {offsets = [0, 0], sizes = [16, 8], strides = [1, 1]} : vector<16x32xf32> to vector<16x8xf32>
    %43 = vector.extract_strided_slice %39 {offsets = [0, 0], sizes = [16, 8], strides = [1, 1]} : vector<16x32xf32> to vector<16x8xf32>
    %44 = vector.extract_strided_slice %40 {offsets = [0, 0], sizes = [16, 8], strides = [1, 1]} : vector<16x32xf32> to vector<16x8xf32>
    %cst_22 = arith.constant dense<0.000000e+00> : vector<16x16xf32>
    %45 = tpu.matmul %42, %43, %cst_22 {dimension_numbers = #tpu.dot_dimension_numbers<[1], [1], [0], [0], [0, 0, 1, 0], [], []>} : vector<16x8xf32>, vector<16x8xf32>, vector<16x16xf32> -> vector<16x16xf32>
    %c0_23 = arith.constant 0 : index
    %c0_24 = arith.constant 0 : index
    %c0_25 = arith.constant 0 : index
    %46 = vector.load %arg2[%c0_23, %c0_24, %c0_25] : memref<4x16x16xf32, #tpu.memory_space<vmem>>, vector<1x16x16xf32>
    %47 = vector.shape_cast %46 : vector<1x16x16xf32> to vector<16x16xf32>
    %48 = arith.addf %45, %47 : vector<16x16xf32>
    %cst_26 = arith.constant dense<0xFF800000> : vector<16xf32>
    %49 = vector.multi_reduction <maximumf>, %48, %cst_26 [1] : vector<16x16xf32> to vector<16xf32>
    %50 = vector.shape_cast %49 : vector<16xf32> to vector<16x1xf32>
    %51 = vector.broadcast %50 : vector<16x1xf32> to vector<16x16xf32>
    %52 = arith.subf %48, %51 : vector<16x16xf32>
    %53 = math.exp %52 : vector<16x16xf32>
    %cst_27 = arith.constant dense<0.000000e+00> : vector<16xf32>
    %54 = vector.multi_reduction <add>, %53, %cst_27 [1] : vector<16x16xf32> to vector<16xf32>
    %55 = vector.shape_cast %54 : vector<16xf32> to vector<16x1xf32>
    %56 = tpu.reciprocal %55 {approx = true} : vector<16x1xf32> -> vector<16x1xf32>
    %57 = vector.broadcast %56 : vector<16x1xf32> to vector<16x16xf32>
    %58 = arith.mulf %53, %57 : vector<16x16xf32>
    %cst_28 = arith.constant dense<0.000000e+00> : vector<16x8xf32>
    %59 = tpu.matmul %58, %44, %cst_28 {dimension_numbers = #tpu.dot_dimension_numbers<[1], [0], [0], [1], [0, 0, 1, 1], [], []>} : vector<16x16xf32>, vector<16x8xf32>, vector<16x8xf32> -> vector<16x8xf32>
    %60 = vector.extract_strided_slice %30 {offsets = [0, 0], sizes = [8, 32], strides = [1, 1]} : vector<32x32xf32> to vector<8x32xf32>
    %cst_29 = arith.constant dense<0.000000e+00> : vector<16x32xf32>
    %61 = tpu.matmul %59, %60, %cst_29 {dimension_numbers = #tpu.dot_dimension_numbers<[1], [0], [0], [1], [0, 0, 1, 1], [], []>} : vector<16x8xf32>, vector<8x32xf32>, vector<16x32xf32> -> vector<16x32xf32>
    %62 = arith.addf %41, %61 : vector<16x32xf32>
    %63 = vector.extract_strided_slice %38 {offsets = [0, 8], sizes = [16, 8], strides = [1, 1]} : vector<16x32xf32> to vector<16x8xf32>
    %64 = vector.extract_strided_slice %39 {offsets = [0, 8], sizes = [16, 8], strides = [1, 1]} : vector<16x32xf32> to vector<16x8xf32>
    %65 = vector.extract_strided_slice %40 {offsets = [0, 8], sizes = [16, 8], strides = [1, 1]} : vector<16x32xf32> to vector<16x8xf32>
    %cst_30 = arith.constant dense<0.000000e+00> : vector<16x16xf32>
    %66 = tpu.matmul %63, %64, %cst_30 {dimension_numbers = #tpu.dot_dimension_numbers<[1], [1], [0], [0], [0, 0, 1, 0], [], []>} : vector<16x8xf32>, vector<16x8xf32>, vector<16x16xf32> -> vector<16x16xf32>
    %c1_31 = arith.constant 1 : index
    %c0_32 = arith.constant 0 : index
    %c0_33 = arith.constant 0 : index
    %67 = vector.load %arg2[%c1_31, %c0_32, %c0_33] : memref<4x16x16xf32, #tpu.memory_space<vmem>>, vector<1x16x16xf32>
    %68 = vector.shape_cast %67 : vector<1x16x16xf32> to vector<16x16xf32>
    %69 = arith.addf %66, %68 : vector<16x16xf32>
    %cst_34 = arith.constant dense<0xFF800000> : vector<16xf32>
    %70 = vector.multi_reduction <maximumf>, %69, %cst_34 [1] : vector<16x16xf32> to vector<16xf32>
    %71 = vector.shape_cast %70 : vector<16xf32> to vector<16x1xf32>
    %72 = vector.broadcast %71 : vector<16x1xf32> to vector<16x16xf32>
    %73 = arith.subf %69, %72 : vector<16x16xf32>
    %74 = math.exp %73 : vector<16x16xf32>
    %cst_35 = arith.constant dense<0.000000e+00> : vector<16xf32>
    %75 = vector.multi_reduction <add>, %74, %cst_35 [1] : vector<16x16xf32> to vector<16xf32>
    %76 = vector.shape_cast %75 : vector<16xf32> to vector<16x1xf32>
    %77 = tpu.reciprocal %76 {approx = true} : vector<16x1xf32> -> vector<16x1xf32>
    %78 = vector.broadcast %77 : vector<16x1xf32> to vector<16x16xf32>
    %79 = arith.mulf %74, %78 : vector<16x16xf32>
    %cst_36 = arith.constant dense<0.000000e+00> : vector<16x8xf32>
    %80 = tpu.matmul %79, %65, %cst_36 {dimension_numbers = #tpu.dot_dimension_numbers<[1], [0], [0], [1], [0, 0, 1, 1], [], []>} : vector<16x16xf32>, vector<16x8xf32>, vector<16x8xf32> -> vector<16x8xf32>
    %81 = vector.extract_strided_slice %30 {offsets = [8, 0], sizes = [8, 32], strides = [1, 1]} : vector<32x32xf32> to vector<8x32xf32>
    %cst_37 = arith.constant dense<0.000000e+00> : vector<16x32xf32>
    %82 = tpu.matmul %80, %81, %cst_37 {dimension_numbers = #tpu.dot_dimension_numbers<[1], [0], [0], [1], [0, 0, 1, 1], [], []>} : vector<16x8xf32>, vector<8x32xf32>, vector<16x32xf32> -> vector<16x32xf32>
    %83 = arith.addf %62, %82 : vector<16x32xf32>
    %84 = vector.extract_strided_slice %38 {offsets = [0, 16], sizes = [16, 8], strides = [1, 1]} : vector<16x32xf32> to vector<16x8xf32>
    %85 = vector.extract_strided_slice %39 {offsets = [0, 16], sizes = [16, 8], strides = [1, 1]} : vector<16x32xf32> to vector<16x8xf32>
    %86 = vector.extract_strided_slice %40 {offsets = [0, 16], sizes = [16, 8], strides = [1, 1]} : vector<16x32xf32> to vector<16x8xf32>
    %cst_38 = arith.constant dense<0.000000e+00> : vector<16x16xf32>
    %87 = tpu.matmul %84, %85, %cst_38 {dimension_numbers = #tpu.dot_dimension_numbers<[1], [1], [0], [0], [0, 0, 1, 0], [], []>} : vector<16x8xf32>, vector<16x8xf32>, vector<16x16xf32> -> vector<16x16xf32>
    %c2_39 = arith.constant 2 : index
    %c0_40 = arith.constant 0 : index
    %c0_41 = arith.constant 0 : index
    %88 = vector.load %arg2[%c2_39, %c0_40, %c0_41] : memref<4x16x16xf32, #tpu.memory_space<vmem>>, vector<1x16x16xf32>
    %89 = vector.shape_cast %88 : vector<1x16x16xf32> to vector<16x16xf32>
    %90 = arith.addf %87, %89 : vector<16x16xf32>
    %cst_42 = arith.constant dense<0xFF800000> : vector<16xf32>
    %91 = vector.multi_reduction <maximumf>, %90, %cst_42 [1] : vector<16x16xf32> to vector<16xf32>
    %92 = vector.shape_cast %91 : vector<16xf32> to vector<16x1xf32>
    %93 = vector.broadcast %92 : vector<16x1xf32> to vector<16x16xf32>
    %94 = arith.subf %90, %93 : vector<16x16xf32>
    %95 = math.exp %94 : vector<16x16xf32>
    %cst_43 = arith.constant dense<0.000000e+00> : vector<16xf32>
    %96 = vector.multi_reduction <add>, %95, %cst_43 [1] : vector<16x16xf32> to vector<16xf32>
    %97 = vector.shape_cast %96 : vector<16xf32> to vector<16x1xf32>
    %98 = tpu.reciprocal %97 {approx = true} : vector<16x1xf32> -> vector<16x1xf32>
    %99 = vector.broadcast %98 : vector<16x1xf32> to vector<16x16xf32>
    %100 = arith.mulf %95, %99 : vector<16x16xf32>
    %cst_44 = arith.constant dense<0.000000e+00> : vector<16x8xf32>
    %101 = tpu.matmul %100, %86, %cst_44 {dimension_numbers = #tpu.dot_dimension_numbers<[1], [0], [0], [1], [0, 0, 1, 1], [], []>} : vector<16x16xf32>, vector<16x8xf32>, vector<16x8xf32> -> vector<16x8xf32>
    %102 = vector.extract_strided_slice %30 {offsets = [16, 0], sizes = [8, 32], strides = [1, 1]} : vector<32x32xf32> to vector<8x32xf32>
    %cst_45 = arith.constant dense<0.000000e+00> : vector<16x32xf32>
    %103 = tpu.matmul %101, %102, %cst_45 {dimension_numbers = #tpu.dot_dimension_numbers<[1], [0], [0], [1], [0, 0, 1, 1], [], []>} : vector<16x8xf32>, vector<8x32xf32>, vector<16x32xf32> -> vector<16x32xf32>
    %104 = arith.addf %83, %103 : vector<16x32xf32>
    %105 = vector.extract_strided_slice %38 {offsets = [0, 24], sizes = [16, 8], strides = [1, 1]} : vector<16x32xf32> to vector<16x8xf32>
    %106 = vector.extract_strided_slice %39 {offsets = [0, 24], sizes = [16, 8], strides = [1, 1]} : vector<16x32xf32> to vector<16x8xf32>
    %107 = vector.extract_strided_slice %40 {offsets = [0, 24], sizes = [16, 8], strides = [1, 1]} : vector<16x32xf32> to vector<16x8xf32>
    %cst_46 = arith.constant dense<0.000000e+00> : vector<16x16xf32>
    %108 = tpu.matmul %105, %106, %cst_46 {dimension_numbers = #tpu.dot_dimension_numbers<[1], [1], [0], [0], [0, 0, 1, 0], [], []>} : vector<16x8xf32>, vector<16x8xf32>, vector<16x16xf32> -> vector<16x16xf32>
    %c3_47 = arith.constant 3 : index
    %c0_48 = arith.constant 0 : index
    %c0_49 = arith.constant 0 : index
    %109 = vector.load %arg2[%c3_47, %c0_48, %c0_49] : memref<4x16x16xf32, #tpu.memory_space<vmem>>, vector<1x16x16xf32>
    %110 = vector.shape_cast %109 : vector<1x16x16xf32> to vector<16x16xf32>
    %111 = arith.addf %108, %110 : vector<16x16xf32>
    %cst_50 = arith.constant dense<0xFF800000> : vector<16xf32>
    %112 = vector.multi_reduction <maximumf>, %111, %cst_50 [1] : vector<16x16xf32> to vector<16xf32>
    %113 = vector.shape_cast %112 : vector<16xf32> to vector<16x1xf32>
    %114 = vector.broadcast %113 : vector<16x1xf32> to vector<16x16xf32>
    %115 = arith.subf %111, %114 : vector<16x16xf32>
    %116 = math.exp %115 : vector<16x16xf32>
    %cst_51 = arith.constant dense<0.000000e+00> : vector<16xf32>
    %117 = vector.multi_reduction <add>, %116, %cst_51 [1] : vector<16x16xf32> to vector<16xf32>
    %118 = vector.shape_cast %117 : vector<16xf32> to vector<16x1xf32>
    %119 = tpu.reciprocal %118 {approx = true} : vector<16x1xf32> -> vector<16x1xf32>
    %120 = vector.broadcast %119 : vector<16x1xf32> to vector<16x16xf32>
    %121 = arith.mulf %116, %120 : vector<16x16xf32>
    %cst_52 = arith.constant dense<0.000000e+00> : vector<16x8xf32>
    %122 = tpu.matmul %121, %107, %cst_52 {dimension_numbers = #tpu.dot_dimension_numbers<[1], [0], [0], [1], [0, 0, 1, 1], [], []>} : vector<16x16xf32>, vector<16x8xf32>, vector<16x8xf32> -> vector<16x8xf32>
    %123 = vector.extract_strided_slice %30 {offsets = [24, 0], sizes = [8, 32], strides = [1, 1]} : vector<32x32xf32> to vector<8x32xf32>
    %cst_53 = arith.constant dense<0.000000e+00> : vector<16x32xf32>
    %124 = tpu.matmul %122, %123, %cst_53 {dimension_numbers = #tpu.dot_dimension_numbers<[1], [0], [0], [1], [0, 0, 1, 1], [], []>} : vector<16x8xf32>, vector<8x32xf32>, vector<16x32xf32> -> vector<16x32xf32>
    %125 = arith.addf %104, %124 : vector<16x32xf32>
    %126 = arith.addf %0, %125 : vector<16x32xf32>
    %127 = vector.broadcast %32 : vector<1x32xf32> to vector<16x32xf32>
    %128 = arith.addf %126, %127 : vector<16x32xf32>
    %cst_54 = arith.constant dense<0.000000e+00> : vector<16xf32>
    %129 = vector.multi_reduction <add>, %128, %cst_54 [1] : vector<16x32xf32> to vector<16xf32>
    %130 = vector.shape_cast %129 : vector<16xf32> to vector<16x1xf32>
    %cst_55 = arith.constant 3.200000e+01 : f32
    %131 = vector.broadcast %cst_55 : f32 to vector<16x1xf32>
    %132 = arith.divf %130, %131 : vector<16x1xf32>
    %133 = vector.broadcast %132 : vector<16x1xf32> to vector<16x32xf32>
    %134 = arith.subf %128, %133 : vector<16x32xf32>
    %135 = arith.mulf %134, %134 : vector<16x32xf32>
    %cst_56 = arith.constant dense<0.000000e+00> : vector<16xf32>
    %136 = vector.multi_reduction <add>, %135, %cst_56 [1] : vector<16x32xf32> to vector<16xf32>
    %137 = vector.shape_cast %136 : vector<16xf32> to vector<16x1xf32>
    %cst_57 = arith.constant 3.200000e+01 : f32
    %138 = vector.broadcast %cst_57 : f32 to vector<16x1xf32>
    %139 = arith.divf %137, %138 : vector<16x1xf32>
    %140 = vector.broadcast %132 : vector<16x1xf32> to vector<16x32xf32>
    %141 = arith.subf %128, %140 : vector<16x32xf32>
    %cst_58 = arith.constant 9.99999974E-6 : f32
    %142 = vector.broadcast %cst_58 : f32 to vector<16x1xf32>
    %143 = arith.addf %139, %142 : vector<16x1xf32>
    %144 = math.rsqrt %143 : vector<16x1xf32>
    %145 = vector.broadcast %144 : vector<16x1xf32> to vector<16x32xf32>
    %146 = arith.mulf %141, %145 : vector<16x32xf32>
    %147 = vector.broadcast %3 : vector<1x32xf32> to vector<16x32xf32>
    %148 = arith.mulf %146, %147 : vector<16x32xf32>
    %149 = vector.broadcast %4 : vector<1x32xf32> to vector<16x32xf32>
    %150 = arith.addf %148, %149 : vector<16x32xf32>
    %c0_59 = arith.constant 0 : index
    %c0_60 = arith.constant 0 : index
    %151 = vector.load %arg6[%c0_59, %c0_60] : memref<32x64xf32, #tpu.memory_space<vmem>>, vector<32x64xf32>
    %cst_61 = arith.constant dense<0.000000e+00> : vector<16x64xf32>
    %152 = tpu.matmul %150, %151, %cst_61 {dimension_numbers = #tpu.dot_dimension_numbers<[1], [0], [0], [1], [0, 0, 1, 1], [], []>} : vector<16x32xf32>, vector<32x64xf32>, vector<16x64xf32> -> vector<16x64xf32>
    %c0_62 = arith.constant 0 : index
    %c0_63 = arith.constant 0 : index
    %153 = vector.load %arg7[%c0_62, %c0_63] : memref<1x64xf32, #tpu.memory_space<vmem>>, vector<1x64xf32>
    %154 = vector.broadcast %153 : vector<1x64xf32> to vector<16x64xf32>
    %155 = arith.addf %152, %154 : vector<16x64xf32>
    %cst_64 = arith.constant 0.000000e+00 : f32
    %156 = vector.broadcast %cst_64 : f32 to vector<16x64xf32>
    %157 = arith.maximumf %155, %156 : vector<16x64xf32>
    %c0_65 = arith.constant 0 : index
    %c0_66 = arith.constant 0 : index
    %158 = vector.load %arg8[%c0_65, %c0_66] : memref<64x32xf32, #tpu.memory_space<vmem>>, vector<64x32xf32>
    %cst_67 = arith.constant dense<0.000000e+00> : vector<16x32xf32>
    %159 = tpu.matmul %157, %158, %cst_67 {dimension_numbers = #tpu.dot_dimension_numbers<[1], [0], [0], [1], [0, 0, 1, 1], [], []>} : vector<16x64xf32>, vector<64x32xf32>, vector<16x32xf32> -> vector<16x32xf32>
    %160 = arith.addf %128, %159 : vector<16x32xf32>
    %161 = vector.broadcast %5 : vector<1x32xf32> to vector<16x32xf32>
    %162 = arith.addf %160, %161 : vector<16x32xf32>
    %c0_68 = arith.constant 0 : index
    %c0_69 = arith.constant 0 : index
    %163 = vector.load %arg13[%c0_68, %c0_69] : memref<16x32xf32, #tpu.memory_space<vmem>>, vector<16x32xf32>
    tpu.vector_store %arg13[%c0_68, %c0_69], %162 {strides = array<i32>} : memref<16x32xf32, #tpu.memory_space<vmem>>, vector<16x32xf32>,
    %164 = tpu.iota {dimensions = array<i32: 1>} : vector<64x16xi32>
    %c0_70 = arith.constant 0 : index
    %c0_71 = arith.constant 0 : index
    %165 = vector.load %arg10[%c0_70, %c0_71] : memref<64x1xi32, #tpu.memory_space<vmem>>, vector<64x1xi32>
    %166 = vector.broadcast %165 : vector<64x1xi32> to vector<64x16xi32>
    %167 = arith.cmpi eq, %166, %164 : vector<64x16xi32>
    %168 = arith.extui %167 : vector<64x16xi1> to vector<64x16xi32>
    %169 = arith.sitofp %168 : vector<64x16xi32> to vector<64x16xf32>
    %cst_72 = arith.constant dense<0.000000e+00> : vector<64x32xf32>
    %170 = tpu.matmul %169, %162, %cst_72 {dimension_numbers = #tpu.dot_dimension_numbers<[1], [0], [0], [1], [0, 0, 1, 1], [], []>} : vector<64x16xf32>, vector<16x32xf32>, vector<64x32xf32> -> vector<64x32xf32>
    %c0_73 = arith.constant 0 : index
    %c0_74 = arith.constant 0 : index
    %171 = vector.load %arg11[%c0_73, %c0_74] : memref<64x32xf32, #tpu.memory_space<vmem>>, vector<64x32xf32>
    %172 = arith.addf %170, %171 : vector<64x32xf32>
    %173 = tpu.iota {dimensions = array<i32: 0>} : vector<16x64xi32>
    %174 = tpu.iota {dimensions = array<i32: 1>} : vector<16x64xi32>
    %c4_i32 = arith.constant 4 : i32
    %175 = vector.broadcast %c4_i32 : i32 to vector<16x64xi32>
    %176 = arith.muli %173, %175 : vector<16x64xi32>
    %177 = arith.cmpi sge, %174, %176 : vector<16x64xi32>
    %c1_i32 = arith.constant 1 : i32
    %178 = vector.broadcast %c1_i32 : i32 to vector<16x64xi32>
    %179 = arith.addi %173, %178 : vector<16x64xi32>
    %c4_i32_75 = arith.constant 4 : i32
    %180 = vector.broadcast %c4_i32_75 : i32 to vector<16x64xi32>
    %181 = arith.muli %179, %180 : vector<16x64xi32>
    %182 = arith.cmpi slt, %174, %181 : vector<16x64xi32>
    %183 = arith.andi %177, %182 : vector<16x64xi1>
    %cst_76 = arith.constant 2.500000e-01 : f32
    %cst_77 = arith.constant 0.000000e+00 : f32
    %184 = vector.broadcast %cst_76 : f32 to vector<16x64xf32>
    %185 = vector.broadcast %cst_77 : f32 to vector<16x64xf32>
    %186 = arith.select %183, %184, %185 : vector<16x64xi1>, vector<16x64xf32>
    %c0_78 = arith.constant 0 : index
    %c0_79 = arith.constant 0 : index
    %187 = vector.load %arg12[%c0_78, %c0_79] : memref<16x1xf32, #tpu.memory_space<vmem>>, vector<16x1xf32>
    %188 = vector.broadcast %187 : vector<16x1xf32> to vector<16x64xf32>
    %189 = arith.mulf %186, %188 : vector<16x64xf32>
    %cst_80 = arith.constant dense<0.000000e+00> : vector<16x32xf32>
    %190 = tpu.matmul %189, %172, %cst_80 {dimension_numbers = #tpu.dot_dimension_numbers<[1], [0], [0], [1], [0, 0, 1, 1], [], []>} : vector<16x64xf32>, vector<64x32xf32>, vector<16x32xf32> -> vector<16x32xf32>
    %c0_81 = arith.constant 0 : index
    %c0_82 = arith.constant 0 : index
    %191 = vector.load %arg9[%c0_81, %c0_82] : memref<32x32xf32, #tpu.memory_space<vmem>>, vector<32x32xf32>
    %cst_83 = arith.constant dense<0.000000e+00> : vector<16x32xf32>
    %192 = tpu.matmul %190, %191, %cst_83 {dimension_numbers = #tpu.dot_dimension_numbers<[1], [0], [0], [1], [0, 0, 1, 1], [], []>} : vector<16x32xf32>, vector<32x32xf32>, vector<16x32xf32> -> vector<16x32xf32>
    %193 = vector.broadcast %6 : vector<1x32xf32> to vector<16x32xf32>
    %194 = arith.addf %192, %193 : vector<16x32xf32>
    %c0_84 = arith.constant 0 : index
    %c0_85 = arith.constant 0 : index
    %195 = vector.load %arg14[%c0_84, %c0_85] : memref<16x32xf32, #tpu.memory_space<vmem>>, vector<16x32xf32>
    tpu.vector_store %arg14[%c0_84, %c0_85], %194 {strides = array<i32>} : memref<16x32xf32, #tpu.memory_space<vmem>>, vector<16x32xf32>,
    return
  }
  func.func @transform_0(%arg0: i32) -> (i32, i32) {
    %c0_i32 = arith.constant 0 : i32
    %c0_i32_0 = arith.constant 0 : i32
    %c0_i32_1 = arith.constant 0 : i32
    return %c0_i32, %c0_i32_0 : i32, i32
  }
  func.func @transform_1(%arg0: i32) -> (i32, i32, i32) {
    %c0_i32 = arith.constant 0 : i32
    %c0_i32_0 = arith.constant 0 : i32
    %c0_i32_1 = arith.constant 0 : i32
    %c0_i32_2 = arith.constant 0 : i32
    return %c0_i32, %c0_i32_0, %c0_i32_1 : i32, i32, i32
  }
  func.func @transform_2(%arg0: i32) -> (i32, i32) {
    %c0_i32 = arith.constant 0 : i32
    %c0_i32_0 = arith.constant 0 : i32
    %c0_i32_1 = arith.constant 0 : i32
    return %c0_i32, %c0_i32_0 : i32, i32
  }
  func.func @transform_3(%arg0: i32) -> (i32, i32) {
    %c0_i32 = arith.constant 0 : i32
    %c0_i32_0 = arith.constant 0 : i32
    %c0_i32_1 = arith.constant 0 : i32
    return %c0_i32, %c0_i32_0 : i32, i32
  }
  func.func @transform_4(%arg0: i32) -> (i32, i32) {
    %c0_i32 = arith.constant 0 : i32
    %c0_i32_0 = arith.constant 0 : i32
    %c0_i32_1 = arith.constant 0 : i32
    return %c0_i32, %c0_i32_0 : i32, i32
  }
  func.func @transform_5(%arg0: i32) -> (i32, i32) {
    %c0_i32 = arith.constant 0 : i32
    %c0_i32_0 = arith.constant 0 : i32
    %c0_i32_1 = arith.constant 0 : i32
    return %c0_i32, %c0_i32_0 : i32, i32
  }
  func.func @transform_6(%arg0: i32) -> (i32, i32) {
    %c0_i32 = arith.constant 0 : i32
    %c0_i32_0 = arith.constant 0 : i32
    %c0_i32_1 = arith.constant 0 : i32
    return %c0_i32, %c0_i32_0 : i32, i32
  }
  func.func @transform_7(%arg0: i32) -> (i32, i32) {
    %c0_i32 = arith.constant 0 : i32
    %c0_i32_0 = arith.constant 0 : i32
    %c0_i32_1 = arith.constant 0 : i32
    return %c0_i32, %c0_i32_0 : i32, i32
  }
  func.func @transform_8(%arg0: i32) -> (i32, i32) {
    %c0_i32 = arith.constant 0 : i32
    %c0_i32_0 = arith.constant 0 : i32
    %c0_i32_1 = arith.constant 0 : i32
    return %c0_i32, %c0_i32_0 : i32, i32
  }
  func.func @transform_9(%arg0: i32) -> (i32, i32) {
    %c0_i32 = arith.constant 0 : i32
    %c0_i32_0 = arith.constant 0 : i32
    %c0_i32_1 = arith.constant 0 : i32
    return %c0_i32, %c0_i32_0 : i32, i32
  }
  func.func @transform_10(%arg0: i32) -> (i32, i32) {
    %c0_i32 = arith.constant 0 : i32
    %c0_i32_0 = arith.constant 0 : i32
    %c0_i32_1 = arith.constant 0 : i32
    return %c0_i32, %c0_i32_0 : i32, i32
  }
  func.func @transform_11(%arg0: i32) -> (i32, i32) {
    %c0_i32 = arith.constant 0 : i32
    %c0_i32_0 = arith.constant 0 : i32
    %c0_i32_1 = arith.constant 0 : i32
    return %c0_i32, %c0_i32_0 : i32, i32
  }
  func.func @transform_12(%arg0: i32) -> (i32, i32) {
    %c0_i32 = arith.constant 0 : i32
    %c0_i32_0 = arith.constant 0 : i32
    %c0_i32_1 = arith.constant 0 : i32
    return %c0_i32, %c0_i32_0 : i32, i32
  }
  func.func @transform_13(%arg0: i32) -> (i32, i32) {
    %c0_i32 = arith.constant 0 : i32
    %c0_i32_0 = arith.constant 0 : i32
    %c0_i32_1 = arith.constant 0 : i32
    return %c0_i32, %c0_i32_0 : i32, i32
  }
}

</mosaic_0001>

<llo_original>
// kernel: _forward_impl.1
$region0: #{_forward_impl.1}
  #allocation0 [shape = 'u32[]', space=smem, size = 0x4, offset = 0x4, fixed_abs, tag = 'smem constant byte address 0x4 - core index']
  #allocation1 [shape = 'u32[144,128]{1,0:T(1,128)}', space=vmem, size = 0x12000, scoped, tag = 'internal scratch']
  %s0 = inlined_call_operand.vmem [shape: f32[16,32], index: 0, kind: input, shape index: {}]
  %s1 = inlined_call_operand.vmem [shape: f32[4,16,16], index: 1, kind: input, shape index: {}]
  %s2 = inlined_call_operand.vmem [shape: f32[32,128], index: 2, kind: input, shape index: {}]
  %s3 = inlined_call_operand.vmem [shape: f32[1,128], index: 3, kind: input, shape index: {}]
  %s4 = inlined_call_operand.vmem [shape: f32[8,32], index: 4, kind: input, shape index: {}]
  %s5 = inlined_call_operand.vmem [shape: f32[32,64], index: 5, kind: input, shape index: {}]
  %s6 = inlined_call_operand.vmem [shape: f32[1,64], index: 6, kind: input, shape index: {}]
  %s7 = inlined_call_operand.vmem [shape: f32[64,32], index: 7, kind: input, shape index: {}]
  %s8 = inlined_call_operand.vmem [shape: f32[32,32], index: 8, kind: input, shape index: {}]
  %s9 = inlined_call_operand.vmem [shape: s32[64,1], index: 9, kind: input, shape index: {}]
  %s10 = inlined_call_operand.vmem [shape: f32[64,32], index: 10, kind: input, shape index: {}]
  %s11 = inlined_call_operand.vmem [shape: f32[16,1], index: 11, kind: input, shape index: {}]
  %s12 = inlined_call_operand.hbm [shape: f32[16,32], index: 12, kind: output, shape index: {0}]
  %s13 = inlined_call_operand.hbm [shape: f32[16,32], index: 13, kind: output, shape index: {1}]
  %14 = xla_tuple %s12, %s13
  %s15 = sld [smem:[#allocation0]]
  $region66: #{_forward_impl.1} parent=0
    _
  %s17 = ssub.s32 1, %s15
  %s18 = scalar_select 0, %s17, %s15
  $region1: #{_forward_impl.1} parent=0
    #allocation2 [shape = 'u8[8192]{0}', space=vmem, size = 0x2000, scoped, tag = 'output window, operand 0, single buffered']
    #allocation3 [shape = 's32[1]{0}', space=sflag, size = 0x4, scoped, tag = 'scoped memory for _forward_impl.1']
    #allocation4 [shape = 'u8[8192]{0}', space=vmem, size = 0x2000, scoped, tag = 'output window, operand 1, single buffered']
    #allocation5 [shape = 's32[1]{0}', space=sflag, size = 0x4, scoped, tag = 'scoped memory for _forward_impl.1']
    %19 = vsyncpa [#allocation3], 0
    %20 = vsyncpa [#allocation5], 0
    // Predicated region
    $region2: #{_forward_impl.1} parent=1 // pred_check
      _
    $region3: #{_forward_impl.1} parent=1 // pred_check_branch
      %22 = sbr.rel (0) target = $region5
    $region4: #{_forward_impl.1} parent=1 // pred_region
      _
    $region5: #{_forward_impl.1} parent=1 // pred_fallthru
      _
    // Predicated region
    $region6: #{_forward_impl.1} parent=1 // pred_check
      _
    $region7: #{_forward_impl.1} parent=1 // pred_check_branch
      %24 = sbr.rel (0) target = $region9
    $region8: #{_forward_impl.1} parent=1 // pred_region
      _
    $region9: #{_forward_impl.1} parent=1 // pred_fallthru
      _
    // Predicated region
    $region10: #{_forward_impl.1} parent=1 // pred_check
      _
    $region11: #{_forward_impl.1} parent=1 // pred_check_branch
      %26 = sbr.rel (0) target = $region13
    $region12: #{_forward_impl.1} parent=1 // pred_region
      _
    $region13: #{_forward_impl.1} parent=1 // pred_fallthru
      _
    // Predicated region
    $region14: #{_forward_impl.1} parent=1 // pred_check
      _
    $region15: #{_forward_impl.1} parent=1 // pred_check_branch
      %28 = sbr.rel (0) target = $region17
    $region16: #{_forward_impl.1} parent=1 // pred_region
      _
    $region17: #{_forward_impl.1} parent=1 // pred_fallthru
      _
    // Predicated region
    $region18: #{_forward_impl.1} parent=1 // pred_check
      _
    $region19: #{_forward_impl.1} parent=1 // pred_check_branch
      %30 = sbr.rel (0) target = $region21
    $region20: #{_forward_impl.1} parent=1 // pred_region
      _
    $region21: #{_forward_impl.1} parent=1 // pred_fallthru
      _
    // Predicated region
    $region22: #{_forward_impl.1} parent=1 // pred_check
      _
    $region23: #{_forward_impl.1} parent=1 // pred_check_branch
      %32 = sbr.rel (0) target = $region25
    $region24: #{_forward_impl.1} parent=1 // pred_region
      _
    $region25: #{_forward_impl.1} parent=1 // pred_fallthru
      _
    // Predicated region
    $region26: #{_forward_impl.1} parent=1 // pred_check
      _
    $region27: #{_forward_impl.1} parent=1 // pred_check_branch
      %34 = sbr.rel (0) target = $region29
    $region28: #{_forward_impl.1} parent=1 // pred_region
      _
    $region29: #{_forward_impl.1} parent=1 // pred_fallthru
      _
    // Predicated region
    $region30: #{_forward_impl.1} parent=1 // pred_check
      _
    $region31: #{_forward_impl.1} parent=1 // pred_check_branch
      %36 = sbr.rel (0) target = $region33
    $region32: #{_forward_impl.1} parent=1 // pred_region
      _
    $region33: #{_forward_impl.1} parent=1 // pred_fallthru
      _
    // Predicated region
    $region34: #{_forward_impl.1} parent=1 // pred_check
      _
    $region35: #{_forward_impl.1} parent=1 // pred_check_branch
      %38 = sbr.rel (0) target = $region37
    $region36: #{_forward_impl.1} parent=1 // pred_region
      _
    $region37: #{_forward_impl.1} parent=1 // pred_fallthru
      _
    // Predicated region
    $region38: #{_forward_impl.1} parent=1 // pred_check
      _
    $region39: #{_forward_impl.1} parent=1 // pred_check_branch
      %40 = sbr.rel (0) target = $region41
    $region40: #{_forward_impl.1} parent=1 // pred_region
      _
    $region41: #{_forward_impl.1} parent=1 // pred_fallthru
      _
    // Predicated region
    $region42: #{_forward_impl.1} parent=1 // pred_check
      _
    $region43: #{_forward_impl.1} parent=1 // pred_check_branch
      %42 = sbr.rel (0) target = $region45
    $region44: #{_forward_impl.1} parent=1 // pred_region
      _
    $region45: #{_forward_impl.1} parent=1 // pred_fallthru
      _
    // Predicated region
    $region46: #{_forward_impl.1} parent=1 // pred_check
      _
    $region47: #{_forward_impl.1} parent=1 // pred_check_branch
      %44 = sbr.rel (0) target = $region49
    $region48: #{_forward_impl.1} parent=1 // pred_region
      _
    $region49: #{_forward_impl.1} parent=1 // pred_fallthru
      _
    %v45 = vld [vmem:[%s0] sm:$0xff]
    %v46 = vld [vmem:[%s0 + $0x8] sm:$0xff]
    %v47 = vld [vmem:[%s4] sm:$0x1]
    %v48 = vld [vmem:[%s4 + $0x1] sm:$0x1]
    %v49 = vld [vmem:[%s4 + $0x2] sm:$0x1]
    %v50 = vld [vmem:[%s4 + $0x3] sm:$0x1]
    %v51 = vld [vmem:[%s4 + $0x4] sm:$0x1]
    %v52 = vld [vmem:[%s4 + $0x5] sm:$0x1]
    %vm53 = vcmask 261120
    %v54 = vsel %vm53, %v45, 0.0
    %55 = vadd.xlane.f32.xlu0 %v54
    %v56 = vpop.xlane.xlu0 %55
    %v57 = vsel %vm53, %v46, 0.0
    %58 = vadd.xlane.f32.xlu0 %v57
    %v59 = vpop.xlane.xlu0 %58
    %v60 = vrcp.pop 32.0
    %v61 = vmul.f32 %v56, %v60
    %v62 = vmul.f32 %v59, %v60
    %v63 = vsub.f32 %v45, %v61
    %v64 = vsub.f32 %v46, %v62
    %v65 = vmul.f32 %v63, %v63
    %v66 = vmul.f32 %v64, %v64
    %v67 = vsel %vm53, %v65, 0.0
    %68 = vadd.xlane.f32.xlu0 %v67
    %v69 = vpop.xlane.xlu0 %68
    %v70 = vsel %vm53, %v66, 0.0
    %71 = vadd.xlane.f32.xlu0 %v70
    %v72 = vpop.xlane.xlu0 %71
    %v73 = vmul.f32 %v69, %v60
    %v74 = vmul.f32 %v72, %v60
    %v75 = vadd.f32 %v73, 1e-05
    %v76 = vadd.f32 %v74, 1e-05
    %v77 = vrsqrt.pop %v75
    %v78 = vrsqrt.pop %v76
    %v79 = vmul.f32 %v63, %v77
    %v80 = vmul.f32 %v64, %v78
    %v81 = vlaneseq
    %v82 = vshrl.u32 %v81, 7
    %v83 = vsub.s32 0, %v82
    %v84 = vrot.slane %v47, %v83
    %v85 = vmul.f32 %v79, %v84
    %v86 = vmul.f32 %v80, %v84
    %v87 = vlaneseq
    %v88 = vshrl.u32 %v87, 7
    %v89 = vsub.s32 0, %v88
    %v90 = vrot.slane %v48, %v89
    %v91 = vadd.f32 %v85, %v90
    %v92 = vadd.f32 %v86, %v90
    %v93 = vld [vmem:[%s2] sm:$0xff]
    %v94 = vld [vmem:[%s2 + $0x8] sm:$0xff]
    %v95 = vld [vmem:[%s2 + $0x10] sm:$0xff]
    %v96 = vld [vmem:[%s2 + $0x18] sm:$0xff]
    %v97 = vld [vmem:[%s3] sm:$0x1]
    %v99 = vlaneseq
    %v100 = vshrl.u32 %v99, 7
    %v101 = vsub.s32 0, %v100
    %v102 = vrot.slane %v97, %v101
    %v105 = vsel %vm53, %v91, 0
    %v108 = vsel %vm53, %v92, 0
    %110 = vmatprep.subr.mxu0 0.0
    %111 = vmatpush1.msra.mxu0 %v93
    %112 = vmatprep.subr.mxu0 0.0
    %113 = vmatpush1.msra.mxu0 %v94
    %114 = vmatprep.subr.mxu0 0.0
    %115 = vmatpush1.msra.mxu0 %v95
    %116 = vmatprep.subr.mxu0 0.0
    %117 = vmatpush1.msra.mxu0 %v96
    %118 = vmatprep.subr.mxu0 0.0
    %119 = vmatpush1.msra.mxu0 0.0
    %120 = vmatprep.subr.mxu0 0.0
    %121 = vmatpush1.msra.mxu0 0.0
    %122 = vmatprep.subr.mxu0 0.0
    %123 = vmatpush1.msra.mxu0 0.0
    %124 = vmatprep.subr.mxu0 0.0
    %125 = vmatpush1.msra.mxu0 0.0
    %126 = vmatprep.subr.mxu0 0.0
    %127 = vmatpush1.msra.mxu0 0.0
    %128 = vmatprep.subr.mxu0 0.0
    %129 = vmatpush1.msra.mxu0 0.0
    %130 = vmatprep.subr.mxu0 0.0
    %131 = vmatpush1.msra.mxu0 0.0
    %132 = vmatprep.subr.mxu0 0.0
    %133 = vmatpush1.msra.mxu0 0.0
    %134 = vmatprep.subr.mxu0 0.0
    %135 = vmatpush1.msra.mxu0 0.0
    %136 = vmatprep.subr.mxu0 0.0
    %137 = vmatpush1.msra.mxu0 0.0
    %138 = vmatprep.subr.mxu0 0.0
    %139 = vmatpush1.msra.mxu0 0.0
    %140 = vmatprep.subr.mxu0 0.0
    %141 = vmatpush1.msra.mxu0 0.0
    %142 = vmatprep.subr.mxu0 0.0
    %143 = vmatpush1.msra.mxu0 0.0
    %144 = vmatprep.subr.mxu0 0.0
    %145 = vmatpush1.msra.mxu0 0.0
    %146 = vmatprep.subr.mxu0 0.0
    %147 = vmatpush1.msra.mxu0 0.0
    %148 = vmatprep.subr.mxu0 0.0
    %149 = vmatpush1.msra.mxu0 0.0
    %150 = vmatprep.subr.mxu0 0.0
    %151 = vmatpush1.msra.mxu0 0.0
    %152 = vmatprep.subr.mxu0 0.0
    %153 = vmatpush1.msra.mxu0 0.0
    %154 = vmatprep.subr.mxu0 0.0
    %155 = vmatpush1.msra.mxu0 0.0
    %156 = vmatprep.subr.mxu0 0.0
    %157 = vmatpush1.msra.mxu0 0.0
    %158 = vmatprep.subr.mxu0 0.0
    %159 = vmatpush1.msra.mxu0 0.0
    %160 = vmatprep.subr.mxu0 0.0
    %161 = vmatpush1.msra.mxu0 0.0
    %162 = vmatprep.subr.mxu0 0.0
    %163 = vmatpush1.msra.mxu0 0.0
    %164 = vmatprep.subr.mxu0 0.0
    %165 = vmatpush1.msra.mxu0 0.0
    %166 = vmatprep.subr.mxu0 0.0
    %167 = vmatpush1.msra.mxu0 0.0
    %168 = vmatprep.subr.mxu0 0.0
    %169 = vmatpush1.msra.mxu0 0.0
    %170 = vmatprep.subr.mxu0 0.0
    %171 = vmatpush1.msra.mxu0 0.0
    %172 = vmatprep.subr.mxu0 0.0
    %173 = vmatpush1.msra.mxu0 0.0
    %174 = vmatprep.mubr.f32.mxu0 0.0
    %175 = vmatmul.mubr.f32.gmra.mrb[0].mxu0 %v105
    %v176 = vpop.f32.mrb[0].mxu0
    %v177 = vadd.f32 %v102, %v176
    %v178 = vpop.f32.mrb[0].mxu0
    %179 = vmatprep.mubr.f32.mxu0 0.0
    %180 = vmatmul.mubr.f32.gmra.mrb[0].mxu0 %v108
    %v181 = vpop.f32.mrb[0].mxu0
    %v182 = vadd.f32 %v102, %v181
    %v183 = vpop.f32.mrb[0].mxu0
    %184 = vdwg.mxu0
    %v185 = vmul.f32 %v177, 0.35355338
    %v186 = vmul.f32 %v182, 0.35355338
    %v187 = vld [vmem:[%s1] sm:$0xff]
    %v188 = vld [vmem:[%s1 + $0x8] sm:$0xff]
    %191 = vrot.lane.b32.xlu0 %v177, 96
    %v192 = vpop.permute.xlu0 %191
    %193 = vrot.lane.b32.xlu0 %v182, 96
    %v194 = vpop.permute.xlu0 %193
    %vm195 = vcmask 64512
    %v197 = vsel %vm195, %v185, 0
    %v200 = vsel %vm195, %v186, 0
    %v202 = vsel %vm195, %v192, 0
    %v204 = vsel %vm195, %v194, 0
    %206 = vmatprep.subr.mxu0 0.0
    %207 = vmatpush1.xpose.msra.mxu0 %v202
    %208 = vmatprep.subr.mxu0 0.0
    %209 = vmatpush1.xpose.msra.mxu0 %v204
    %210 = vmatprep.subr.mxu0 0.0
    %211 = vmatpush1.xpose.msra.mxu0 0.0
    %212 = vmatprep.subr.mxu0 0.0
    %213 = vmatpush1.xpose.msra.mxu0 0.0
    %214 = vmatprep.subr.mxu0 0.0
    %215 = vmatpush1.xpose.msra.mxu0 0.0
    %216 = vmatprep.subr.mxu0 0.0
    %217 = vmatpush1.xpose.msra.mxu0 0.0
    %218 = vmatprep.subr.mxu0 0.0
    %219 = vmatpush1.xpose.msra.mxu0 0.0
    %220 = vmatprep.subr.mxu0 0.0
    %221 = vmatpush1.xpose.msra.mxu0 0.0
    %222 = vmatprep.subr.mxu0 0.0
    %223 = vmatpush1.xpose.msra.mxu0 0.0
    %224 = vmatprep.subr.mxu0 0.0
    %225 = vmatpush1.xpose.msra.mxu0 0.0
    %226 = vmatprep.subr.mxu0 0.0
    %227 = vmatpush1.xpose.msra.mxu0 0.0
    %228 = vmatprep.subr.mxu0 0.0
    %229 = vmatpush1.xpose.msra.mxu0 0.0
    %230 = vmatprep.subr.mxu0 0.0
    %231 = vmatpush1.xpose.msra.mxu0 0.0
    %232 = vmatprep.subr.mxu0 0.0
    %233 = vmatpush1.xpose.msra.mxu0 0.0
    %234 = vmatprep.subr.mxu0 0.0
    %235 = vmatpush1.xpose.msra.mxu0 0.0
    %236 = vmatprep.subr.mxu0 0.0
    %237 = vmatpush1.xpose.msra.mxu0 0.0
    %238 = vmatprep.subr.mxu0 0.0
    %239 = vmatpush1.xpose.msra.mxu0 0.0
    %240 = vmatprep.subr.mxu0 0.0
    %241 = vmatpush1.xpose.msra.mxu0 0.0
    %242 = vmatprep.subr.mxu0 0.0
    %243 = vmatpush1.xpose.msra.mxu0 0.0
    %244 = vmatprep.subr.mxu0 0.0
    %245 = vmatpush1.xpose.msra.mxu0 0.0
    %246 = vmatprep.subr.mxu0 0.0
    %247 = vmatpush1.xpose.msra.mxu0 0.0
    %248 = vmatprep.subr.mxu0 0.0
    %249 = vmatpush1.xpose.msra.mxu0 0.0
    %250 = vmatprep.subr.mxu0 0.0
    %251 = vmatpush1.xpose.msra.mxu0 0.0
    %252 = vmatprep.subr.mxu0 0.0
    %253 = vmatpush1.xpose.msra.mxu0 0.0
    %254 = vmatprep.subr.mxu0 0.0
    %255 = vmatpush1.xpose.msra.mxu0 0.0
    %256 = vmatprep.subr.mxu0 0.0
    %257 = vmatpush1.xpose.msra.mxu0 0.0
    %258 = vmatprep.subr.mxu0 0.0
    %259 = vmatpush1.xpose.msra.mxu0 0.0
    %260 = vmatprep.subr.mxu0 0.0
    %261 = vmatpush1.xpose.msra.mxu0 0.0
    %262 = vmatprep.subr.mxu0 0.0
    %263 = vmatpush1.xpose.msra.mxu0 0.0
    %264 = vmatprep.subr.mxu0 0.0
    %265 = vmatpush1.xpose.msra.mxu0 0.0
    %266 = vmatprep.subr.mxu0 0.0
    %267 = vmatpush1.xpose.msra.mxu0 0.0
    %268 = vmatprep.subr.mxu0 0.0
    %269 = vmatpush1.xpose.msra.mxu0 0.0
    %270 = vmatprep.mubr.f32.mxu0 0.0
    %271 = vmatmul.mubr.f32.gmra.mrb[0].mxu0 %v197
    %v272 = vpop.f32.mrb[0].mxu0
    %v273 = vadd.f32 %v187, %v272
    %v274 = vpop.f32.mrb[0].mxu0
    %275 = vmatprep.mubr.f32.mxu0 0.0
    %276 = vmatmul.mubr.f32.gmra.mrb[0].mxu0 %v200
    %v277 = vpop.f32.mrb[0].mxu0
    %v278 = vadd.f32 %v188, %v277
    %v279 = vpop.f32.mrb[0].mxu0
    %280 = vdwg.mxu0
    %vm281 = vcmask 130048
    %v282 = vsel %vm281, %v273, -inf
    %283 = vmax.xlane.f32.xlu0 %v282
    %v284 = vpop.xlane.xlu0 %283
    %v285 = vsel %vm281, %v278, -inf
    %286 = vmax.xlane.f32.xlu0 %v285
    %v287 = vpop.xlane.xlu0 %286
    %v288 = vsub.f32 %v273, %v284
    %v289 = vsub.f32 %v278, %v287
    %v290 = vmul.f32 %v288, 1.442695
    %v291 = vpow.pop %v290
    %v292 = vmul.f32 %v289, 1.442695
    %v293 = vpow.pop %v292
    %v294 = vsel %vm281, %v291, 0.0
    %295 = vadd.xlane.f32.xlu0 %v294
    %v296 = vpop.xlane.xlu0 %295
    %v297 = vsel %vm281, %v293, 0.0
    %298 = vadd.xlane.f32.xlu0 %v297
    %v299 = vpop.xlane.xlu0 %298
    %v300 = vrcp.pop %v296
    %v301 = vrcp.pop %v299
    %v302 = vmul.f32 %v291, %v300
    %v303 = vmul.f32 %v293, %v301
    %304 = vrot.lane.b32.xlu0 %v177, 64
    %v305 = vpop.permute.xlu0 %304
    %306 = vrot.lane.b32.xlu0 %v182, 64
    %v307 = vpop.permute.xlu0 %306
    %v311 = vsel %vm281, %v302, 0
    %v314 = vsel %vm281, %v303, 0
    %316 = vmatprep.subr.mxu0 0.0
    %317 = vmatpush1.msra.mxu0 %v305
    %318 = vmatprep.subr.mxu0 0.0
    %319 = vmatpush1.msra.mxu0 %v307
    %320 = vmatprep.subr.mxu0 0.0
    %321 = vmatpush1.msra.mxu0 0.0
    %322 = vmatprep.subr.mxu0 0.0
    %323 = vmatpush1.msra.mxu0 0.0
    %324 = vmatprep.subr.mxu0 0.0
    %325 = vmatpush1.msra.mxu0 0.0
    %326 = vmatprep.subr.mxu0 0.0
    %327 = vmatpush1.msra.mxu0 0.0
    %328 = vmatprep.subr.mxu0 0.0
    %329 = vmatpush1.msra.mxu0 0.0
    %330 = vmatprep.subr.mxu0 0.0
    %331 = vmatpush1.msra.mxu0 0.0
    %332 = vmatprep.subr.mxu0 0.0
    %333 = vmatpush1.msra.mxu0 0.0
    %334 = vmatprep.subr.mxu0 0.0
    %335 = vmatpush1.msra.mxu0 0.0
    %336 = vmatprep.subr.mxu0 0.0
    %337 = vmatpush1.msra.mxu0 0.0
    %338 = vmatprep.subr.mxu0 0.0
    %339 = vmatpush1.msra.mxu0 0.0
    %340 = vmatprep.subr.mxu0 0.0
    %341 = vmatpush1.msra.mxu0 0.0
    %342 = vmatprep.subr.mxu0 0.0
    %343 = vmatpush1.msra.mxu0 0.0
    %344 = vmatprep.subr.mxu0 0.0
    %345 = vmatpush1.msra.mxu0 0.0
    %346 = vmatprep.subr.mxu0 0.0
    %347 = vmatpush1.msra.mxu0 0.0
    %348 = vmatprep.subr.mxu0 0.0
    %349 = vmatpush1.msra.mxu0 0.0
    %350 = vmatprep.subr.mxu0 0.0
    %351 = vmatpush1.msra.mxu0 0.0
    %352 = vmatprep.subr.mxu0 0.0
    %353 = vmatpush1.msra.mxu0 0.0
    %354 = vmatprep.subr.mxu0 0.0
    %355 = vmatpush1.msra.mxu0 0.0
    %356 = vmatprep.subr.mxu0 0.0
    %357 = vmatpush1.msra.mxu0 0.0
    %358 = vmatprep.subr.mxu0 0.0
    %359 = vmatpush1.msra.mxu0 0.0
    %360 = vmatprep.subr.mxu0 0.0
    %361 = vmatpush1.msra.mxu0 0.0
    %362 = vmatprep.subr.mxu0 0.0
    %363 = vmatpush1.msra.mxu0 0.0
    %364 = vmatprep.subr.mxu0 0.0
    %365 = vmatpush1.msra.mxu0 0.0
    %366 = vmatprep.subr.mxu0 0.0
    %367 = vmatpush1.msra.mxu0 0.0
    %368 = vmatprep.subr.mxu0 0.0
    %369 = vmatpush1.msra.mxu0 0.0
    %370 = vmatprep.subr.mxu0 0.0
    %371 = vmatpush1.msra.mxu0 0.0
    %372 = vmatprep.subr.mxu0 0.0
    %373 = vmatpush1.msra.mxu0 0.0
    %374 = vmatprep.subr.mxu0 0.0
    %375 = vmatpush1.msra.mxu0 0.0
    %376 = vmatprep.subr.mxu0 0.0
    %377 = vmatpush1.msra.mxu0 0.0
    %378 = vmatprep.subr.mxu0 0.0
    %379 = vmatpush1.msra.mxu0 0.0
    %380 = vmatprep.mubr.f32.mxu0 0.0
    %381 = vmatmul.mubr.f32.gmra.mrb[0].mxu0 %v311
    %v382 = vpop.f32.mrb[0].mxu0
    %v383 = vadd.f32 0.0, %v382
    %v384 = vpop.f32.mrb[0].mxu0
    %385 = vmatprep.mubr.f32.mxu0 0.0
    %386 = vmatmul.mubr.f32.gmra.mrb[0].mxu0 %v314
    %v387 = vpop.f32.mrb[0].mxu0
    %v388 = vadd.f32 0.0, %v387
    %v389 = vpop.f32.mrb[0].mxu0
    %390 = vdwg.mxu0
    %s391 = scalar_lea.vmem %s1, 16
    %v392 = vld [vmem:[%s391] sm:$0xff]
    %v393 = vld [vmem:[%s391 + $0x8] sm:$0xff]
    %394 = vrot.lane.b32.xlu0 %v185, 120
    %v395 = vpop.permute.xlu0 %394
    %396 = vrot.lane.b32.xlu0 %v186, 120
    %v397 = vpop.permute.xlu0 %396
    %398 = vrot.lane.b32.xlu0 %v177, 88
    %v399 = vpop.permute.xlu0 %398
    %400 = vrot.lane.b32.xlu0 %v182, 88
    %v401 = vpop.permute.xlu0 %400
    %v402 = vsel %vm195, %v395, 0
    %v404 = vsel %vm195, %v397, 0
    %v406 = vsel %vm195, %v399, 0
    %v408 = vsel %vm195, %v401, 0
    %410 = vmatprep.subr.mxu0 0.0
    %411 = vmatpush1.xpose.msra.mxu0 %v406
    %412 = vmatprep.subr.mxu0 0.0
    %413 = vmatpush1.xpose.msra.mxu0 %v408
    %414 = vmatprep.subr.mxu0 0.0
    %415 = vmatpush1.xpose.msra.mxu0 0.0
    %416 = vmatprep.subr.mxu0 0.0
    %417 = vmatpush1.xpose.msra.mxu0 0.0
    %418 = vmatprep.subr.mxu0 0.0
    %419 = vmatpush1.xpose.msra.mxu0 0.0
    %420 = vmatprep.subr.mxu0 0.0
    %421 = vmatpush1.xpose.msra.mxu0 0.0
    %422 = vmatprep.subr.mxu0 0.0
    %423 = vmatpush1.xpose.msra.mxu0 0.0
    %424 = vmatprep.subr.mxu0 0.0
    %425 = vmatpush1.xpose.msra.mxu0 0.0
    %426 = vmatprep.subr.mxu0 0.0
    %427 = vmatpush1.xpose.msra.mxu0 0.0
    %428 = vmatprep.subr.mxu0 0.0
    %429 = vmatpush1.xpose.msra.mxu0 0.0
    %430 = vmatprep.subr.mxu0 0.0
    %431 = vmatpush1.xpose.msra.mxu0 0.0
    %432 = vmatprep.subr.mxu0 0.0
    %433 = vmatpush1.xpose.msra.mxu0 0.0
    %434 = vmatprep.subr.mxu0 0.0
    %435 = vmatpush1.xpose.msra.mxu0 0.0
    %436 = vmatprep.subr.mxu0 0.0
    %437 = vmatpush1.xpose.msra.mxu0 0.0
    %438 = vmatprep.subr.mxu0 0.0
    %439 = vmatpush1.xpose.msra.mxu0 0.0
    %440 = vmatprep.subr.mxu0 0.0
    %441 = vmatpush1.xpose.msra.mxu0 0.0
    %442 = vmatprep.subr.mxu0 0.0
    %443 = vmatpush1.xpose.msra.mxu0 0.0
    %444 = vmatprep.subr.mxu0 0.0
    %445 = vmatpush1.xpose.msra.mxu0 0.0
    %446 = vmatprep.subr.mxu0 0.0
    %447 = vmatpush1.xpose.msra.mxu0 0.0
    %448 = vmatprep.subr.mxu0 0.0
    %449 = vmatpush1.xpose.msra.mxu0 0.0
    %450 = vmatprep.subr.mxu0 0.0
    %451 = vmatpush1.xpose.msra.mxu0 0.0
    %452 = vmatprep.subr.mxu0 0.0
    %453 = vmatpush1.xpose.msra.mxu0 0.0
    %454 = vmatprep.subr.mxu0 0.0
    %455 = vmatpush1.xpose.msra.mxu0 0.0
    %456 = vmatprep.subr.mxu0 0.0
    %457 = vmatpush1.xpose.msra.mxu0 0.0
    %458 = vmatprep.subr.mxu0 0.0
    %459 = vmatpush1.xpose.msra.mxu0 0.0
    %460 = vmatprep.subr.mxu0 0.0
    %461 = vmatpush1.xpose.msra.mxu0 0.0
    %462 = vmatprep.subr.mxu0 0.0
    %463 = vmatpush1.xpose.msra.mxu0 0.0
    %464 = vmatprep.subr.mxu0 0.0
    %465 = vmatpush1.xpose.msra.mxu0 0.0
    %466 = vmatprep.subr.mxu0 0.0
    %467 = vmatpush1.xpose.msra.mxu0 0.0
    %468 = vmatprep.subr.mxu0 0.0
    %469 = vmatpush1.xpose.msra.mxu0 0.0
    %470 = vmatprep.subr.mxu0 0.0
    %471 = vmatpush1.xpose.msra.mxu0 0.0
    %472 = vmatprep.subr.mxu0 0.0
    %473 = vmatpush1.xpose.msra.mxu0 0.0
    %474 = vmatprep.mubr.f32.mxu0 0.0
    %475 = vmatmul.mubr.f32.gmra.mrb[0].mxu0 %v402
    %v476 = vpop.f32.mrb[0].mxu0
    %v477 = vadd.f32 %v392, %v476
    %v478 = vpop.f32.mrb[0].mxu0
    %479 = vmatprep.mubr.f32.mxu0 0.0
    %480 = vmatmul.mubr.f32.gmra.mrb[0].mxu0 %v404
    %v481 = vpop.f32.mrb[0].mxu0
    %v482 = vadd.f32 %v393, %v481
    %v483 = vpop.f32.mrb[0].mxu0
    %484 = vdwg.mxu0
    %v485 = vsel %vm281, %v477, -inf
    %486 = vmax.xlane.f32.xlu0 %v485
    %v487 = vpop.xlane.xlu0 %486
    %v488 = vsel %vm281, %v482, -inf
    %489 = vmax.xlane.f32.xlu0 %v488
    %v490 = vpop.xlane.xlu0 %489
    %v491 = vsub.f32 %v477, %v487
    %v492 = vsub.f32 %v482, %v490
    %v493 = vmul.f32 %v491, 1.442695
    %v494 = vpow.pop %v493
    %v495 = vmul.f32 %v492, 1.442695
    %v496 = vpow.pop %v495
    %v497 = vsel %vm281, %v494, 0.0
    %498 = vadd.xlane.f32.xlu0 %v497
    %v499 = vpop.xlane.xlu0 %498
    %v500 = vsel %vm281, %v496, 0.0
    %501 = vadd.xlane.f32.xlu0 %v500
    %v502 = vpop.xlane.xlu0 %501
    %v503 = vrcp.pop %v499
    %v504 = vrcp.pop %v502
    %v505 = vmul.f32 %v494, %v503
    %v506 = vmul.f32 %v496, %v504
    %507 = vrot.lane.b32.xlu0 %v177, 56
    %v508 = vpop.permute.xlu0 %507
    %509 = vrot.lane.b32.xlu0 %v182, 56
    %v510 = vpop.permute.xlu0 %509
    %v514 = vsel %vm281, %v505, 0
    %v517 = vsel %vm281, %v506, 0
    %519 = vmatprep.subr.mxu0 0.0
    %520 = vmatpush1.msra.mxu0 %v508
    %521 = vmatprep.subr.mxu0 0.0
    %522 = vmatpush1.msra.mxu0 %v510
    %523 = vmatprep.subr.mxu0 0.0
    %524 = vmatpush1.msra.mxu0 0.0
    %525 = vmatprep.subr.mxu0 0.0
    %526 = vmatpush1.msra.mxu0 0.0
    %527 = vmatprep.subr.mxu0 0.0
    %528 = vmatpush1.msra.mxu0 0.0
    %529 = vmatprep.subr.mxu0 0.0
    %530 = vmatpush1.msra.mxu0 0.0
    %531 = vmatprep.subr.mxu0 0.0
    %532 = vmatpush1.msra.mxu0 0.0
    %533 = vmatprep.subr.mxu0 0.0
    %534 = vmatpush1.msra.mxu0 0.0
    %535 = vmatprep.subr.mxu0 0.0
    %536 = vmatpush1.msra.mxu0 0.0
    %537 = vmatprep.subr.mxu0 0.0
    %538 = vmatpush1.msra.mxu0 0.0
    %539 = vmatprep.subr.mxu0 0.0
    %540 = vmatpush1.msra.mxu0 0.0
    %541 = vmatprep.subr.mxu0 0.0
    %542 = vmatpush1.msra.mxu0 0.0
    %543 = vmatprep.subr.mxu0 0.0
    %544 = vmatpush1.msra.mxu0 0.0
    %545 = vmatprep.subr.mxu0 0.0
    %546 = vmatpush1.msra.mxu0 0.0
    %547 = vmatprep.subr.mxu0 0.0
    %548 = vmatpush1.msra.mxu0 0.0
    %549 = vmatprep.subr.mxu0 0.0
    %550 = vmatpush1.msra.mxu0 0.0
    %551 = vmatprep.subr.mxu0 0.0
    %552 = vmatpush1.msra.mxu0 0.0
    %553 = vmatprep.subr.mxu0 0.0
    %554 = vmatpush1.msra.mxu0 0.0
    %555 = vmatprep.subr.mxu0 0.0
    %556 = vmatpush1.msra.mxu0 0.0
    %557 = vmatprep.subr.mxu0 0.0
    %558 = vmatpush1.msra.mxu0 0.0
    %559 = vmatprep.subr.mxu0 0.0
    %560 = vmatpush1.msra.mxu0 0.0
    %561 = vmatprep.subr.mxu0 0.0
    %562 = vmatpush1.msra.mxu0 0.0
    %563 = vmatprep.subr.mxu0 0.0
    %564 = vmatpush1.msra.mxu0 0.0
    %565 = vmatprep.subr.mxu0 0.0
    %566 = vmatpush1.msra.mxu0 0.0
    %567 = vmatprep.subr.mxu0 0.0
    %568 = vmatpush1.msra.mxu0 0.0
    %569 = vmatprep.subr.mxu0 0.0
    %570 = vmatpush1.msra.mxu0 0.0
    %571 = vmatprep.subr.mxu0 0.0
    %572 = vmatpush1.msra.mxu0 0.0
    %573 = vmatprep.subr.mxu0 0.0
    %574 = vmatpush1.msra.mxu0 0.0
    %575 = vmatprep.subr.mxu0 0.0
    %576 = vmatpush1.msra.mxu0 0.0
    %577 = vmatprep.subr.mxu0 0.0
    %578 = vmatpush1.msra.mxu0 0.0
    %579 = vmatprep.subr.mxu0 0.0
    %580 = vmatpush1.msra.mxu0 0.0
    %581 = vmatprep.subr.mxu0 0.0
    %582 = vmatpush1.msra.mxu0 0.0
    %583 = vmatprep.mubr.f32.mxu0 0.0
    %584 = vmatmul.mubr.f32.gmra.mrb[0].mxu0 %v514
    %v585 = vpop.f32.mrb[0].mxu0
    %v586 = vadd.f32 0.0, %v585
    %v587 = vpop.f32.mrb[0].mxu0
    %588 = vmatprep.mubr.f32.mxu0 0.0
    %589 = vmatmul.mubr.f32.gmra.mrb[0].mxu0 %v517
    %v590 = vpop.f32.mrb[0].mxu0
    %v591 = vadd.f32 0.0, %v590
    %v592 = vpop.f32.mrb[0].mxu0
    %593 = vdwg.mxu0
    %595 = vrot.lane.b32.xlu0 %v94, 32
    %v596 = vpop.permute.xlu0 %595
    %v599 = vsel %vm195, %v586, 0
    %v602 = vsel %vm195, %v591, 0
    %604 = vmatprep.subr.mxu0 0.0
    %605 = vmatpush1.msra.mxu0 %v596
    %606 = vmatprep.subr.mxu0 0.0
    %607 = vmatpush1.msra.mxu0 0.0
    %608 = vmatprep.subr.mxu0 0.0
    %609 = vmatpush1.msra.mxu0 0.0
    %610 = vmatprep.subr.mxu0 0.0
    %611 = vmatpush1.msra.mxu0 0.0
    %612 = vmatprep.subr.mxu0 0.0
    %613 = vmatpush1.msra.mxu0 0.0
    %614 = vmatprep.subr.mxu0 0.0
    %615 = vmatpush1.msra.mxu0 0.0
    %616 = vmatprep.subr.mxu0 0.0
    %617 = vmatpush1.msra.mxu0 0.0
    %618 = vmatprep.subr.mxu0 0.0
    %619 = vmatpush1.msra.mxu0 0.0
    %620 = vmatprep.subr.mxu0 0.0
    %621 = vmatpush1.msra.mxu0 0.0
    %622 = vmatprep.subr.mxu0 0.0
    %623 = vmatpush1.msra.mxu0 0.0
    %624 = vmatprep.subr.mxu0 0.0
    %625 = vmatpush1.msra.mxu0 0.0
    %626 = vmatprep.subr.mxu0 0.0
    %627 = vmatpush1.msra.mxu0 0.0
    %628 = vmatprep.subr.mxu0 0.0
    %629 = vmatpush1.msra.mxu0 0.0
    %630 = vmatprep.subr.mxu0 0.0
    %631 = vmatpush1.msra.mxu0 0.0
    %632 = vmatprep.subr.mxu0 0.0
    %633 = vmatpush1.msra.mxu0 0.0
    %634 = vmatprep.subr.mxu0 0.0
    %635 = vmatpush1.msra.mxu0 0.0
    %636 = vmatprep.subr.mxu0 0.0
    %637 = vmatpush1.msra.mxu0 0.0
    %638 = vmatprep.subr.mxu0 0.0
    %639 = vmatpush1.msra.mxu0 0.0
    %640 = vmatprep.subr.mxu0 0.0
    %641 = vmatpush1.msra.mxu0 0.0
    %642 = vmatprep.subr.mxu0 0.0
    %643 = vmatpush1.msra.mxu0 0.0
    %644 = vmatprep.subr.mxu0 0.0
    %645 = vmatpush1.msra.mxu0 0.0
    %646 = vmatprep.subr.mxu0 0.0
    %647 = vmatpush1.msra.mxu0 0.0
    %648 = vmatprep.subr.mxu0 0.0
    %649 = vmatpush1.msra.mxu0 0.0
    %650 = vmatprep.subr.mxu0 0.0
    %651 = vmatpush1.msra.mxu0 0.0
    %652 = vmatprep.subr.mxu0 0.0
    %653 = vmatpush1.msra.mxu0 0.0
    %654 = vmatprep.subr.mxu0 0.0
    %655 = vmatpush1.msra.mxu0 0.0
    %656 = vmatprep.subr.mxu0 0.0
    %657 = vmatpush1.msra.mxu0 0.0
    %658 = vmatprep.subr.mxu0 0.0
    %659 = vmatpush1.msra.mxu0 0.0
    %660 = vmatprep.subr.mxu0 0.0
    %661 = vmatpush1.msra.mxu0 0.0
    %662 = vmatprep.subr.mxu0 0.0
    %663 = vmatpush1.msra.mxu0 0.0
    %664 = vmatprep.subr.mxu0 0.0
    %665 = vmatpush1.msra.mxu0 0.0
    %666 = vmatprep.subr.mxu0 0.0
    %667 = vmatpush1.msra.mxu0 0.0
    %668 = vmatprep.mubr.f32.mxu0 0.0
    %669 = vmatmul.mubr.f32.gmra.mrb[0].mxu0 %v599
    %v670 = vpop.f32.mrb[0].mxu0
    %v671 = vadd.f32 0.0, %v670
    %v672 = vpop.f32.mrb[0].mxu0
    %673 = vmatprep.mubr.f32.mxu0 0.0
    %674 = vmatmul.mubr.f32.gmra.mrb[0].mxu0 %v602
    %v675 = vpop.f32.mrb[0].mxu0
    %v676 = vadd.f32 0.0, %v675
    %v677 = vpop.f32.mrb[0].mxu0
    %678 = vdwg.mxu0
    %680 = vrot.lane.b32.xlu0 %v93, 32
    %v681 = vpop.permute.xlu0 %680
    %v684 = vsel %vm195, %v383, 0
    %v687 = vsel %vm195, %v388, 0
    %689 = vmatprep.subr.mxu0 0.0
    %690 = vmatpush1.msra.mxu0 %v681
    %691 = vmatprep.subr.mxu0 0.0
    %692 = vmatpush1.msra.mxu0 0.0
    %693 = vmatprep.subr.mxu0 0.0
    %694 = vmatpush1.msra.mxu0 0.0
    %695 = vmatprep.subr.mxu0 0.0
    %696 = vmatpush1.msra.mxu0 0.0
    %697 = vmatprep.subr.mxu0 0.0
    %698 = vmatpush1.msra.mxu0 0.0
    %699 = vmatprep.subr.mxu0 0.0
    %700 = vmatpush1.msra.mxu0 0.0
    %701 = vmatprep.subr.mxu0 0.0
    %702 = vmatpush1.msra.mxu0 0.0
    %703 = vmatprep.subr.mxu0 0.0
    %704 = vmatpush1.msra.mxu0 0.0
    %705 = vmatprep.subr.mxu0 0.0
    %706 = vmatpush1.msra.mxu0 0.0
    %707 = vmatprep.subr.mxu0 0.0
    %708 = vmatpush1.msra.mxu0 0.0
    %709 = vmatprep.subr.mxu0 0.0
    %710 = vmatpush1.msra.mxu0 0.0
    %711 = vmatprep.subr.mxu0 0.0
    %712 = vmatpush1.msra.mxu0 0.0
    %713 = vmatprep.subr.mxu0 0.0
    %714 = vmatpush1.msra.mxu0 0.0
    %715 = vmatprep.subr.mxu0 0.0
    %716 = vmatpush1.msra.mxu0 0.0
    %717 = vmatprep.subr.mxu0 0.0
    %718 = vmatpush1.msra.mxu0 0.0
    %719 = vmatprep.subr.mxu0 0.0
    %720 = vmatpush1.msra.mxu0 0.0
    %721 = vmatprep.subr.mxu0 0.0
    %722 = vmatpush1.msra.mxu0 0.0
    %723 = vmatprep.subr.mxu0 0.0
    %724 = vmatpush1.msra.mxu0 0.0
    %725 = vmatprep.subr.mxu0 0.0
    %726 = vmatpush1.msra.mxu0 0.0
    %727 = vmatprep.subr.mxu0 0.0
    %728 = vmatpush1.msra.mxu0 0.0
    %729 = vmatprep.subr.mxu0 0.0
    %730 = vmatpush1.msra.mxu0 0.0
    %731 = vmatprep.subr.mxu0 0.0
    %732 = vmatpush1.msra.mxu0 0.0
    %733 = vmatprep.subr.mxu0 0.0
    %734 = vmatpush1.msra.mxu0 0.0
    %735 = vmatprep.subr.mxu0 0.0
    %736 = vmatpush1.msra.mxu0 0.0
    %737 = vmatprep.subr.mxu0 0.0
    %738 = vmatpush1.msra.mxu0 0.0
    %739 = vmatprep.subr.mxu0 0.0
    %740 = vmatpush1.msra.mxu0 0.0
    %741 = vmatprep.subr.mxu0 0.0
    %742 = vmatpush1.msra.mxu0 0.0
    %743 = vmatprep.subr.mxu0 0.0
    %744 = vmatpush1.msra.mxu0 0.0
    %745 = vmatprep.subr.mxu0 0.0
    %746 = vmatpush1.msra.mxu0 0.0
    %747 = vmatprep.subr.mxu0 0.0
    %748 = vmatpush1.msra.mxu0 0.0
    %749 = vmatprep.subr.mxu0 0.0
    %750 = vmatpush1.msra.mxu0 0.0
    %751 = vmatprep.subr.mxu0 0.0
    %752 = vmatpush1.msra.mxu0 0.0
    %753 = vmatprep.mubr.f32.mxu0 0.0
    %754 = vmatmul.mubr.f32.gmra.mrb[0].mxu0 %v684
    %v755 = vpop.f32.mrb[0].mxu0
    %v756 = vadd.f32 %v671, %v755
    %v757 = vpop.f32.mrb[0].mxu0
    %758 = vmatprep.mubr.f32.mxu0 0.0
    %759 = vmatmul.mubr.f32.gmra.mrb[0].mxu0 %v687
    %v760 = vpop.f32.mrb[0].mxu0
    %v761 = vadd.f32 %v676, %v760
    %v762 = vpop.f32.mrb[0].mxu0
    %763 = vdwg.mxu0
    %s764 = scalar_lea.vmem %s1, 32
    %v765 = vld [vmem:[%s764] sm:$0xff]
    %v766 = vld [vmem:[%s764 + $0x8] sm:$0xff]
    %767 = vrot.lane.b32.xlu0 %v185, 112
    %v768 = vpop.permute.xlu0 %767
    %769 = vrot.lane.b32.xlu0 %v186, 112
    %v770 = vpop.permute.xlu0 %769
    %771 = vrot.lane.b32.xlu0 %v177, 80
    %v772 = vpop.permute.xlu0 %771
    %773 = vrot.lane.b32.xlu0 %v182, 80
    %v774 = vpop.permute.xlu0 %773
    %v775 = vsel %vm195, %v768, 0
    %v777 = vsel %vm195, %v770, 0
    %v779 = vsel %vm195, %v772, 0
    %v781 = vsel %vm195, %v774, 0
    %783 = vmatprep.subr.mxu0 0.0
    %784 = vmatpush1.xpose.msra.mxu0 %v779
    %785 = vmatprep.subr.mxu0 0.0
    %786 = vmatpush1.xpose.msra.mxu0 %v781
    %787 = vmatprep.subr.mxu0 0.0
    %788 = vmatpush1.xpose.msra.mxu0 0.0
    %789 = vmatprep.subr.mxu0 0.0
    %790 = vmatpush1.xpose.msra.mxu0 0.0
    %791 = vmatprep.subr.mxu0 0.0
    %792 = vmatpush1.xpose.msra.mxu0 0.0
    %793 = vmatprep.subr.mxu0 0.0
    %794 = vmatpush1.xpose.msra.mxu0 0.0
    %795 = vmatprep.subr.mxu0 0.0
    %796 = vmatpush1.xpose.msra.mxu0 0.0
    %797 = vmatprep.subr.mxu0 0.0
    %798 = vmatpush1.xpose.msra.mxu0 0.0
    %799 = vmatprep.subr.mxu0 0.0
    %800 = vmatpush1.xpose.msra.mxu0 0.0
    %801 = vmatprep.subr.mxu0 0.0
    %802 = vmatpush1.xpose.msra.mxu0 0.0
    %803 = vmatprep.subr.mxu0 0.0
    %804 = vmatpush1.xpose.msra.mxu0 0.0
    %805 = vmatprep.subr.mxu0 0.0
    %806 = vmatpush1.xpose.msra.mxu0 0.0
    %807 = vmatprep.subr.mxu0 0.0
    %808 = vmatpush1.xpose.msra.mxu0 0.0
    %809 = vmatprep.subr.mxu0 0.0
    %810 = vmatpush1.xpose.msra.mxu0 0.0
    %811 = vmatprep.subr.mxu0 0.0
    %812 = vmatpush1.xpose.msra.mxu0 0.0
    %813 = vmatprep.subr.mxu0 0.0
    %814 = vmatpush1.xpose.msra.mxu0 0.0
    %815 = vmatprep.subr.mxu0 0.0
    %816 = vmatpush1.xpose.msra.mxu0 0.0
    %817 = vmatprep.subr.mxu0 0.0
    %818 = vmatpush1.xpose.msra.mxu0 0.0
    %819 = vmatprep.subr.mxu0 0.0
    %820 = vmatpush1.xpose.msra.mxu0 0.0
    %821 = vmatprep.subr.mxu0 0.0
    %822 = vmatpush1.xpose.msra.mxu0 0.0
    %823 = vmatprep.subr.mxu0 0.0
    %824 = vmatpush1.xpose.msra.mxu0 0.0
    %825 = vmatprep.subr.mxu0 0.0
    %826 = vmatpush1.xpose.msra.mxu0 0.0
    %827 = vmatprep.subr.mxu0 0.0
    %828 = vmatpush1.xpose.msra.mxu0 0.0
    %829 = vmatprep.subr.mxu0 0.0
    %830 = vmatpush1.xpose.msra.mxu0 0.0
    %831 = vmatprep.subr.mxu0 0.0
    %832 = vmatpush1.xpose.msra.mxu0 0.0
    %833 = vmatprep.subr.mxu0 0.0
    %834 = vmatpush1.xpose.msra.mxu0 0.0
    %835 = vmatprep.subr.mxu0 0.0
    %836 = vmatpush1.xpose.msra.mxu0 0.0
    %837 = vmatprep.subr.mxu0 0.0
    %838 = vmatpush1.xpose.msra.mxu0 0.0
    %839 = vmatprep.subr.mxu0 0.0
    %840 = vmatpush1.xpose.msra.mxu0 0.0
    %841 = vmatprep.subr.mxu0 0.0
    %842 = vmatpush1.xpose.msra.mxu0 0.0
    %843 = vmatprep.subr.mxu0 0.0
    %844 = vmatpush1.xpose.msra.mxu0 0.0
    %845 = vmatprep.subr.mxu0 0.0
    %846 = vmatpush1.xpose.msra.mxu0 0.0
    %847 = vmatprep.mubr.f32.mxu0 0.0
    %848 = vmatmul.mubr.f32.gmra.mrb[0].mxu0 %v775
    %v849 = vpop.f32.mrb[0].mxu0
    %v850 = vadd.f32 %v765, %v849
    %v851 = vpop.f32.mrb[0].mxu0
    %852 = vmatprep.mubr.f32.mxu0 0.0
    %853 = vmatmul.mubr.f32.gmra.mrb[0].mxu0 %v777
    %v854 = vpop.f32.mrb[0].mxu0
    %v855 = vadd.f32 %v766, %v854
    %v856 = vpop.f32.mrb[0].mxu0
    %857 = vdwg.mxu0
    %v858 = vsel %vm281, %v850, -inf
    %859 = vmax.xlane.f32.xlu0 %v858
    %v860 = vpop.xlane.xlu0 %859
    %v861 = vsel %vm281, %v855, -inf
    %862 = vmax.xlane.f32.xlu0 %v861
    %v863 = vpop.xlane.xlu0 %862
    %v864 = vsub.f32 %v850, %v860
    %v865 = vsub.f32 %v855, %v863
    %v866 = vmul.f32 %v864, 1.442695
    %v867 = vpow.pop %v866
    %v868 = vmul.f32 %v865, 1.442695
    %v869 = vpow.pop %v868
    %v870 = vsel %vm281, %v867, 0.0
    %871 = vadd.xlane.f32.xlu0 %v870
    %v872 = vpop.xlane.xlu0 %871
    %v873 = vsel %vm281, %v869, 0.0
    %874 = vadd.xlane.f32.xlu0 %v873
    %v875 = vpop.xlane.xlu0 %874
    %v876 = vrcp.pop %v872
    %v877 = vrcp.pop %v875
    %v878 = vmul.f32 %v867, %v876
    %v879 = vmul.f32 %v869, %v877
    %880 = vrot.lane.b32.xlu0 %v177, 48
    %v881 = vpop.permute.xlu0 %880
    %882 = vrot.lane.b32.xlu0 %v182, 48
    %v883 = vpop.permute.xlu0 %882
    %v887 = vsel %vm281, %v878, 0
    %v890 = vsel %vm281, %v879, 0
    %892 = vmatprep.subr.mxu0 0.0
    %893 = vmatpush1.msra.mxu0 %v881
    %894 = vmatprep.subr.mxu0 0.0
    %895 = vmatpush1.msra.mxu0 %v883
    %896 = vmatprep.subr.mxu0 0.0
    %897 = vmatpush1.msra.mxu0 0.0
    %898 = vmatprep.subr.mxu0 0.0
    %899 = vmatpush1.msra.mxu0 0.0
    %900 = vmatprep.subr.mxu0 0.0
    %901 = vmatpush1.msra.mxu0 0.0
    %902 = vmatprep.subr.mxu0 0.0
    %903 = vmatpush1.msra.mxu0 0.0
    %904 = vmatprep.subr.mxu0 0.0
    %905 = vmatpush1.msra.mxu0 0.0
    %906 = vmatprep.subr.mxu0 0.0
    %907 = vmatpush1.msra.mxu0 0.0
    %908 = vmatprep.subr.mxu0 0.0
    %909 = vmatpush1.msra.mxu0 0.0
    %910 = vmatprep.subr.mxu0 0.0
    %911 = vmatpush1.msra.mxu0 0.0
    %912 = vmatprep.subr.mxu0 0.0
    %913 = vmatpush1.msra.mxu0 0.0
    %914 = vmatprep.subr.mxu0 0.0
    %915 = vmatpush1.msra.mxu0 0.0
    %916 = vmatprep.subr.mxu0 0.0
    %917 = vmatpush1.msra.mxu0 0.0
    %918 = vmatprep.subr.mxu0 0.0
    %919 = vmatpush1.msra.mxu0 0.0
    %920 = vmatprep.subr.mxu0 0.0
    %921 = vmatpush1.msra.mxu0 0.0
    %922 = vmatprep.subr.mxu0 0.0
    %923 = vmatpush1.msra.mxu0 0.0
    %924 = vmatprep.subr.mxu0 0.0
    %925 = vmatpush1.msra.mxu0 0.0
    %926 = vmatprep.subr.mxu0 0.0
    %927 = vmatpush1.msra.mxu0 0.0
    %928 = vmatprep.subr.mxu0 0.0
    %929 = vmatpush1.msra.mxu0 0.0
    %930 = vmatprep.subr.mxu0 0.0
    %931 = vmatpush1.msra.mxu0 0.0
    %932 = vmatprep.subr.mxu0 0.0
    %933 = vmatpush1.msra.mxu0 0.0
    %934 = vmatprep.subr.mxu0 0.0
    %935 = vmatpush1.msra.mxu0 0.0
    %936 = vmatprep.subr.mxu0 0.0
    %937 = vmatpush1.msra.mxu0 0.0
    %938 = vmatprep.subr.mxu0 0.0
    %939 = vmatpush1.msra.mxu0 0.0
    %940 = vmatprep.subr.mxu0 0.0
    %941 = vmatpush1.msra.mxu0 0.0
    %942 = vmatprep.subr.mxu0 0.0
    %943 = vmatpush1.msra.mxu0 0.0
    %944 = vmatprep.subr.mxu0 0.0
    %945 = vmatpush1.msra.mxu0 0.0
    %946 = vmatprep.subr.mxu0 0.0
    %947 = vmatpush1.msra.mxu0 0.0
    %948 = vmatprep.subr.mxu0 0.0
    %949 = vmatpush1.msra.mxu0 0.0
    %950 = vmatprep.subr.mxu0 0.0
    %951 = vmatpush1.msra.mxu0 0.0
    %952 = vmatprep.subr.mxu0 0.0
    %953 = vmatpush1.msra.mxu0 0.0
    %954 = vmatprep.subr.mxu0 0.0
    %955 = vmatpush1.msra.mxu0 0.0
    %956 = vmatprep.mubr.f32.mxu0 0.0
    %957 = vmatmul.mubr.f32.gmra.mrb[0].mxu0 %v887
    %v958 = vpop.f32.mrb[0].mxu0
    %v959 = vadd.f32 0.0, %v958
    %v960 = vpop.f32.mrb[0].mxu0
    %961 = vmatprep.mubr.f32.mxu0 0.0
    %962 = vmatmul.mubr.f32.gmra.mrb[0].mxu0 %v890
    %v963 = vpop.f32.mrb[0].mxu0
    %v964 = vadd.f32 0.0, %v963
    %v965 = vpop.f32.mrb[0].mxu0
    %966 = vdwg.mxu0
    %968 = vrot.lane.b32.xlu0 %v95, 32
    %v969 = vpop.permute.xlu0 %968
    %v972 = vsel %vm195, %v959, 0
    %v975 = vsel %vm195, %v964, 0
    %977 = vmatprep.subr.mxu0 0.0
    %978 = vmatpush1.msra.mxu0 %v969
    %979 = vmatprep.subr.mxu0 0.0
    %980 = vmatpush1.msra.mxu0 0.0
    %981 = vmatprep.subr.mxu0 0.0
    %982 = vmatpush1.msra.mxu0 0.0
    %983 = vmatprep.subr.mxu0 0.0
    %984 = vmatpush1.msra.mxu0 0.0
    %985 = vmatprep.subr.mxu0 0.0
    %986 = vmatpush1.msra.mxu0 0.0
    %987 = vmatprep.subr.mxu0 0.0
    %988 = vmatpush1.msra.mxu0 0.0
    %989 = vmatprep.subr.mxu0 0.0
    %990 = vmatpush1.msra.mxu0 0.0
    %991 = vmatprep.subr.mxu0 0.0
    %992 = vmatpush1.msra.mxu0 0.0
    %993 = vmatprep.subr.mxu0 0.0
    %994 = vmatpush1.msra.mxu0 0.0
    %995 = vmatprep.subr.mxu0 0.0
    %996 = vmatpush1.msra.mxu0 0.0
    %997 = vmatprep.subr.mxu0 0.0
    %998 = vmatpush1.msra.mxu0 0.0
    %999 = vmatprep.subr.mxu0 0.0
    %1000 = vmatpush1.msra.mxu0 0.0
    %1001 = vmatprep.subr.mxu0 0.0
    %1002 = vmatpush1.msra.mxu0 0.0
    %1003 = vmatprep.subr.mxu0 0.0
    %1004 = vmatpush1.msra.mxu0 0.0
    %1005 = vmatprep.subr.mxu0 0.0
    %1006 = vmatpush1.msra.mxu0 0.0
    %1007 = vmatprep.subr.mxu0 0.0
    %1008 = vmatpush1.msra.mxu0 0.0
    %1009 = vmatprep.subr.mxu0 0.0
    %1010 = vmatpush1.msra.mxu0 0.0
    %1011 = vmatprep.subr.mxu0 0.0
    %1012 = vmatpush1.msra.mxu0 0.0
    %1013 = vmatprep.subr.mxu0 0.0
    %1014 = vmatpush1.msra.mxu0 0.0
    %1015 = vmatprep.subr.mxu0 0.0
    %1016 = vmatpush1.msra.mxu0 0.0
    %1017 = vmatprep.subr.mxu0 0.0
    %1018 = vmatpush1.msra.mxu0 0.0
    %1019 = vmatprep.subr.mxu0 0.0
    %1020 = vmatpush1.msra.mxu0 0.0
    %1021 = vmatprep.subr.mxu0 0.0
    %1022 = vmatpush1.msra.mxu0 0.0
    %1023 = vmatprep.subr.mxu0 0.0
    %1024 = vmatpush1.msra.mxu0 0.0
    %1025 = vmatprep.subr.mxu0 0.0
    %1026 = vmatpush1.msra.mxu0 0.0
    %1027 = vmatprep.subr.mxu0 0.0
    %1028 = vmatpush1.msra.mxu0 0.0
    %1029 = vmatprep.subr.mxu0 0.0
    %1030 = vmatpush1.msra.mxu0 0.0
    %1031 = vmatprep.subr.mxu0 0.0
    %1032 = vmatpush1.msra.mxu0 0.0
    %1033 = vmatprep.subr.mxu0 0.0
    %1034 = vmatpush1.msra.mxu0 0.0
    %1035 = vmatprep.subr.mxu0 0.0
    %1036 = vmatpush1.msra.mxu0 0.0
    %1037 = vmatprep.subr.mxu0 0.0
    %1038 = vmatpush1.msra.mxu0 0.0
    %1039 = vmatprep.subr.mxu0 0.0
    %1040 = vmatpush1.msra.mxu0 0.0
    %1041 = vmatprep.mubr.f32.mxu0 0.0
    %1042 = vmatmul.mubr.f32.gmra.mrb[0].mxu0 %v972
    %v1043 = vpop.f32.mrb[0].mxu0
    %v1044 = vadd.f32 0.0, %v1043
    %v1045 = vpop.f32.mrb[0].mxu0
    %1046 = vmatprep.mubr.f32.mxu0 0.0
    %1047 = vmatmul.mubr.f32.gmra.mrb[0].mxu0 %v975
    %v1048 = vpop.f32.mrb[0].mxu0
    %v1049 = vadd.f32 0.0, %v1048
    %v1050 = vpop.f32.mrb[0].mxu0
    %1051 = vdwg.mxu0
    %v1052 = vadd.f32 %v756, %v1044
    %v1053 = vadd.f32 %v761, %v1049
    %s1054 = scalar_lea.vmem %s1, 48
    %v1055 = vld [vmem:[%s1054] sm:$0xff]
    %v1056 = vld [vmem:[%s1054 + $0x8] sm:$0xff]
    %1057 = vrot.lane.b32.xlu0 %v185, 104
    %v1058 = vpop.permute.xlu0 %1057
    %1059 = vrot.lane.b32.xlu0 %v186, 104
    %v1060 = vpop.permute.xlu0 %1059
    %1061 = vrot.lane.b32.xlu0 %v177, 72
    %v1062 = vpop.permute.xlu0 %1061
    %1063 = vrot.lane.b32.xlu0 %v182, 72
    %v1064 = vpop.permute.xlu0 %1063
    %v1065 = vsel %vm195, %v1058, 0
    %v1067 = vsel %vm195, %v1060, 0
    %v1069 = vsel %vm195, %v1062, 0
    %v1071 = vsel %vm195, %v1064, 0
    %1073 = vmatprep.subr.mxu0 0.0
    %1074 = vmatpush1.xpose.msra.mxu0 %v1069
    %1075 = vmatprep.subr.mxu0 0.0
    %1076 = vmatpush1.xpose.msra.mxu0 %v1071
    %1077 = vmatprep.subr.mxu0 0.0
    %1078 = vmatpush1.xpose.msra.mxu0 0.0
    %1079 = vmatprep.subr.mxu0 0.0
    %1080 = vmatpush1.xpose.msra.mxu0 0.0
    %1081 = vmatprep.subr.mxu0 0.0
    %1082 = vmatpush1.xpose.msra.mxu0 0.0
    %1083 = vmatprep.subr.mxu0 0.0
    %1084 = vmatpush1.xpose.msra.mxu0 0.0
    %1085 = vmatprep.subr.mxu0 0.0
    %1086 = vmatpush1.xpose.msra.mxu0 0.0
    %1087 = vmatprep.subr.mxu0 0.0
    %1088 = vmatpush1.xpose.msra.mxu0 0.0
    %1089 = vmatprep.subr.mxu0 0.0
    %1090 = vmatpush1.xpose.msra.mxu0 0.0
    %1091 = vmatprep.subr.mxu0 0.0
    %1092 = vmatpush1.xpose.msra.mxu0 0.0
    %1093 = vmatprep.subr.mxu0 0.0
    %1094 = vmatpush1.xpose.msra.mxu0 0.0
    %1095 = vmatprep.subr.mxu0 0.0
    %1096 = vmatpush1.xpose.msra.mxu0 0.0
    %1097 = vmatprep.subr.mxu0 0.0
    %1098 = vmatpush1.xpose.msra.mxu0 0.0
    %1099 = vmatprep.subr.mxu0 0.0
    %1100 = vmatpush1.xpose.msra.mxu0 0.0
    %1101 = vmatprep.subr.mxu0 0.0
    %1102 = vmatpush1.xpose.msra.mxu0 0.0
    %1103 = vmatprep.subr.mxu0 0.0
    %1104 = vmatpush1.xpose.msra.mxu0 0.0
    %1105 = vmatprep.subr.mxu0 0.0
    %1106 = vmatpush1.xpose.msra.mxu0 0.0
    %1107 = vmatprep.subr.mxu0 0.0
    %1108 = vmatpush1.xpose.msra.mxu0 0.0
    %1109 = vmatprep.subr.mxu0 0.0
    %1110 = vmatpush1.xpose.msra.mxu0 0.0
    %1111 = vmatprep.subr.mxu0 0.0
    %1112 = vmatpush1.xpose.msra.mxu0 0.0
    %1113 = vmatprep.subr.mxu0 0.0
    %1114 = vmatpush1.xpose.msra.mxu0 0.0
    %1115 = vmatprep.subr.mxu0 0.0
    %1116 = vmatpush1.xpose.msra.mxu0 0.0
    %1117 = vmatprep.subr.mxu0 0.0
    %1118 = vmatpush1.xpose.msra.mxu0 0.0
    %1119 = vmatprep.subr.mxu0 0.0
    %1120 = vmatpush1.xpose.msra.mxu0 0.0
    %1121 = vmatprep.subr.mxu0 0.0
    %1122 = vmatpush1.xpose.msra.mxu0 0.0
    %1123 = vmatprep.subr.mxu0 0.0
    %1124 = vmatpush1.xpose.msra.mxu0 0.0
    %1125 = vmatprep.subr.mxu0 0.0
    %1126 = vmatpush1.xpose.msra.mxu0 0.0
    %1127 = vmatprep.subr.mxu0 0.0
    %1128 = vmatpush1.xpose.msra.mxu0 0.0
    %1129 = vmatprep.subr.mxu0 0.0
    %1130 = vmatpush1.xpose.msra.mxu0 0.0
    %1131 = vmatprep.subr.mxu0 0.0
    %1132 = vmatpush1.xpose.msra.mxu0 0.0
    %1133 = vmatprep.subr.mxu0 0.0
    %1134 = vmatpush1.xpose.msra.mxu0 0.0
    %1135 = vmatprep.subr.mxu0 0.0
    %1136 = vmatpush1.xpose.msra.mxu0 0.0
    %1137 = vmatprep.mubr.f32.mxu0 0.0
    %1138 = vmatmul.mubr.f32.gmra.mrb[0].mxu0 %v1065
    %v1139 = vpop.f32.mrb[0].mxu0
    %v1140 = vadd.f32 %v1055, %v1139
    %v1141 = vpop.f32.mrb[0].mxu0
    %1142 = vmatprep.mubr.f32.mxu0 0.0
    %1143 = vmatmul.mubr.f32.gmra.mrb[0].mxu0 %v1067
    %v1144 = vpop.f32.mrb[0].mxu0
    %v1145 = vadd.f32 %v1056, %v1144
    %v1146 = vpop.f32.mrb[0].mxu0
    %1147 = vdwg.mxu0
    %v1148 = vsel %vm281, %v1140, -inf
    %1149 = vmax.xlane.f32.xlu0 %v1148
    %v1150 = vpop.xlane.xlu0 %1149
    %v1151 = vsel %vm281, %v1145, -inf
    %1152 = vmax.xlane.f32.xlu0 %v1151
    %v1153 = vpop.xlane.xlu0 %1152
    %v1154 = vsub.f32 %v1140, %v1150
    %v1155 = vsub.f32 %v1145, %v1153
    %v1156 = vmul.f32 %v1154, 1.442695
    %v1157 = vpow.pop %v1156
    %v1158 = vmul.f32 %v1155, 1.442695
    %v1159 = vpow.pop %v1158
    %v1160 = vsel %vm281, %v1157, 0.0
    %1161 = vadd.xlane.f32.xlu0 %v1160
    %v1162 = vpop.xlane.xlu0 %1161
    %v1163 = vsel %vm281, %v1159, 0.0
    %1164 = vadd.xlane.f32.xlu0 %v1163
    %v1165 = vpop.xlane.xlu0 %1164
    %v1166 = vrcp.pop %v1162
    %v1167 = vrcp.pop %v1165
    %v1168 = vmul.f32 %v1157, %v1166
    %v1169 = vmul.f32 %v1159, %v1167
    %1170 = vrot.lane.b32.xlu0 %v177, 40
    %v1171 = vpop.permute.xlu0 %1170
    %1172 = vrot.lane.b32.xlu0 %v182, 40
    %v1173 = vpop.permute.xlu0 %1172
    %v1177 = vsel %vm281, %v1168, 0
    %v1180 = vsel %vm281, %v1169, 0
    %1182 = vmatprep.subr.mxu0 0.0
    %1183 = vmatpush1.msra.mxu0 %v1171
    %1184 = vmatprep.subr.mxu0 0.0
    %1185 = vmatpush1.msra.mxu0 %v1173
    %1186 = vmatprep.subr.mxu0 0.0
    %1187 = vmatpush1.msra.mxu0 0.0
    %1188 = vmatprep.subr.mxu0 0.0
    %1189 = vmatpush1.msra.mxu0 0.0
    %1190 = vmatprep.subr.mxu0 0.0
    %1191 = vmatpush1.msra.mxu0 0.0
    %1192 = vmatprep.subr.mxu0 0.0
    %1193 = vmatpush1.msra.mxu0 0.0
    %1194 = vmatprep.subr.mxu0 0.0
    %1195 = vmatpush1.msra.mxu0 0.0
    %1196 = vmatprep.subr.mxu0 0.0
    %1197 = vmatpush1.msra.mxu0 0.0
    %1198 = vmatprep.subr.mxu0 0.0
    %1199 = vmatpush1.msra.mxu0 0.0
    %1200 = vmatprep.subr.mxu0 0.0
    %1201 = vmatpush1.msra.mxu0 0.0
    %1202 = vmatprep.subr.mxu0 0.0
    %1203 = vmatpush1.msra.mxu0 0.0
    %1204 = vmatprep.subr.mxu0 0.0
    %1205 = vmatpush1.msra.mxu0 0.0
    %1206 = vmatprep.subr.mxu0 0.0
    %1207 = vmatpush1.msra.mxu0 0.0
    %1208 = vmatprep.subr.mxu0 0.0
    %1209 = vmatpush1.msra.mxu0 0.0
    %1210 = vmatprep.subr.mxu0 0.0
    %1211 = vmatpush1.msra.mxu0 0.0
    %1212 = vmatprep.subr.mxu0 0.0
    %1213 = vmatpush1.msra.mxu0 0.0
    %1214 = vmatprep.subr.mxu0 0.0
    %1215 = vmatpush1.msra.mxu0 0.0
    %1216 = vmatprep.subr.mxu0 0.0
    %1217 = vmatpush1.msra.mxu0 0.0
    %1218 = vmatprep.subr.mxu0 0.0
    %1219 = vmatpush1.msra.mxu0 0.0
    %1220 = vmatprep.subr.mxu0 0.0
    %1221 = vmatpush1.msra.mxu0 0.0
    %1222 = vmatprep.subr.mxu0 0.0
    %1223 = vmatpush1.msra.mxu0 0.0
    %1224 = vmatprep.subr.mxu0 0.0
    %1225 = vmatpush1.msra.mxu0 0.0
    %1226 = vmatprep.subr.mxu0 0.0
    %1227 = vmatpush1.msra.mxu0 0.0
    %1228 = vmatprep.subr.mxu0 0.0
    %1229 = vmatpush1.msra.mxu0 0.0
    %1230 = vmatprep.subr.mxu0 0.0
    %1231 = vmatpush1.msra.mxu0 0.0
    %1232 = vmatprep.subr.mxu0 0.0
    %1233 = vmatpush1.msra.mxu0 0.0
    %1234 = vmatprep.subr.mxu0 0.0
    %1235 = vmatpush1.msra.mxu0 0.0
    %1236 = vmatprep.subr.mxu0 0.0
    %1237 = vmatpush1.msra.mxu0 0.0
    %1238 = vmatprep.subr.mxu0 0.0
    %1239 = vmatpush1.msra.mxu0 0.0
    %1240 = vmatprep.subr.mxu0 0.0
    %1241 = vmatpush1.msra.mxu0 0.0
    %1242 = vmatprep.subr.mxu0 0.0
    %1243 = vmatpush1.msra.mxu0 0.0
    %1244 = vmatprep.subr.mxu0 0.0
    %1245 = vmatpush1.msra.mxu0 0.0
    %1246 = vmatprep.mubr.f32.mxu0 0.0
    %1247 = vmatmul.mubr.f32.gmra.mrb[0].mxu0 %v1177
    %v1248 = vpop.f32.mrb[0].mxu0
    %v1249 = vadd.f32 0.0, %v1248
    %v1250 = vpop.f32.mrb[0].mxu0
    %1251 = vmatprep.mubr.f32.mxu0 0.0
    %1252 = vmatmul.mubr.f32.gmra.mrb[0].mxu0 %v1180
    %v1253 = vpop.f32.mrb[0].mxu0
    %v1254 = vadd.f32 0.0, %v1253
    %v1255 = vpop.f32.mrb[0].mxu0
    %1256 = vdwg.mxu0
    %1258 = vrot.lane.b32.xlu0 %v96, 32
    %v1259 = vpop.permute.xlu0 %1258
    %v1262 = vsel %vm195, %v1249, 0
    %v1265 = vsel %vm195, %v1254, 0
    %1267 = vmatprep.subr.mxu0 0.0
    %1268 = vmatpush1.msra.mxu0 %v1259
    %1269 = vmatprep.subr.mxu0 0.0
    %1270 = vmatpush1.msra.mxu0 0.0
    %1271 = vmatprep.subr.mxu0 0.0
    %1272 = vmatpush1.msra.mxu0 0.0
    %1273 = vmatprep.subr.mxu0 0.0
    %1274 = vmatpush1.msra.mxu0 0.0
    %1275 = vmatprep.subr.mxu0 0.0
    %1276 = vmatpush1.msra.mxu0 0.0
    %1277 = vmatprep.subr.mxu0 0.0
    %1278 = vmatpush1.msra.mxu0 0.0
    %1279 = vmatprep.subr.mxu0 0.0
    %1280 = vmatpush1.msra.mxu0 0.0
    %1281 = vmatprep.subr.mxu0 0.0
    %1282 = vmatpush1.msra.mxu0 0.0
    %1283 = vmatprep.subr.mxu0 0.0
    %1284 = vmatpush1.msra.mxu0 0.0
    %1285 = vmatprep.subr.mxu0 0.0
    %1286 = vmatpush1.msra.mxu0 0.0
    %1287 = vmatprep.subr.mxu0 0.0
    %1288 = vmatpush1.msra.mxu0 0.0
    %1289 = vmatprep.subr.mxu0 0.0
    %1290 = vmatpush1.msra.mxu0 0.0
    %1291 = vmatprep.subr.mxu0 0.0
    %1292 = vmatpush1.msra.mxu0 0.0
    %1293 = vmatprep.subr.mxu0 0.0
    %1294 = vmatpush1.msra.mxu0 0.0
    %1295 = vmatprep.subr.mxu0 0.0
    %1296 = vmatpush1.msra.mxu0 0.0
    %1297 = vmatprep.subr.mxu0 0.0
    %1298 = vmatpush1.msra.mxu0 0.0
    %1299 = vmatprep.subr.mxu0 0.0
    %1300 = vmatpush1.msra.mxu0 0.0
    %1301 = vmatprep.subr.mxu0 0.0
    %1302 = vmatpush1.msra.mxu0 0.0
    %1303 = vmatprep.subr.mxu0 0.0
    %1304 = vmatpush1.msra.mxu0 0.0
    %1305 = vmatprep.subr.mxu0 0.0
    %1306 = vmatpush1.msra.mxu0 0.0
    %1307 = vmatprep.subr.mxu0 0.0
    %1308 = vmatpush1.msra.mxu0 0.0
    %1309 = vmatprep.subr.mxu0 0.0
    %1310 = vmatpush1.msra.mxu0 0.0
    %1311 = vmatprep.subr.mxu0 0.0
    %1312 = vmatpush1.msra.mxu0 0.0
    %1313 = vmatprep.subr.mxu0 0.0
    %1314 = vmatpush1.msra.mxu0 0.0
    %1315 = vmatprep.subr.mxu0 0.0
    %1316 = vmatpush1.msra.mxu0 0.0
    %1317 = vmatprep.subr.mxu0 0.0
    %1318 = vmatpush1.msra.mxu0 0.0
    %1319 = vmatprep.subr.mxu0 0.0
    %1320 = vmatpush1.msra.mxu0 0.0
    %1321 = vmatprep.subr.mxu0 0.0
    %1322 = vmatpush1.msra.mxu0 0.0
    %1323 = vmatprep.subr.mxu0 0.0
    %1324 = vmatpush1.msra.mxu0 0.0
    %1325 = vmatprep.subr.mxu0 0.0
    %1326 = vmatpush1.msra.mxu0 0.0
    %1327 = vmatprep.subr.mxu0 0.0
    %1328 = vmatpush1.msra.mxu0 0.0
    %1329 = vmatprep.subr.mxu0 0.0
    %1330 = vmatpush1.msra.mxu0 0.0
    %1331 = vmatprep.mubr.f32.mxu0 0.0
    %1332 = vmatmul.mubr.f32.gmra.mrb[0].mxu0 %v1262
    %v1333 = vpop.f32.mrb[0].mxu0
    %v1334 = vadd.f32 0.0, %v1333
    %v1335 = vpop.f32.mrb[0].mxu0
    %1336 = vmatprep.mubr.f32.mxu0 0.0
    %1337 = vmatmul.mubr.f32.gmra.mrb[0].mxu0 %v1265
    %v1338 = vpop.f32.mrb[0].mxu0
    %v1339 = vadd.f32 0.0, %v1338
    %v1340 = vpop.f32.mrb[0].mxu0
    %1341 = vdwg.mxu0
    %v1342 = vadd.f32 %v1052, %v1334
    %v1343 = vadd.f32 %v1053, %v1339
    %v1344 = vadd.f32 %v45, %v1342
    %v1345 = vadd.f32 %v46, %v1343
    %1346 = vrot.lane.b32.xlu0 %v102, 32
    %v1347 = vpop.permute.xlu0 %1346
    %v1349 = vadd.f32 %v1344, %v1347
    %v1350 = vadd.f32 %v1345, %v1347
    %v1351 = vsel %vm53, %v1349, 0.0
    %1352 = vadd.xlane.f32.xlu0 %v1351
    %v1353 = vpop.xlane.xlu0 %1352
    %v1354 = vsel %vm53, %v1350, 0.0
    %1355 = vadd.xlane.f32.xlu0 %v1354
    %v1356 = vpop.xlane.xlu0 %1355
    %v1357 = vmul.f32 %v1353, %v60
    %v1358 = vmul.f32 %v1356, %v60
    %v1359 = vsub.f32 %v1349, %v1357
    %v1360 = vsub.f32 %v1350, %v1358
    %v1361 = vmul.f32 %v1359, %v1359
    %v1362 = vmul.f32 %v1360, %v1360
    %v1363 = vsel %vm53, %v1361, 0.0
    %1364 = vadd.xlane.f32.xlu0 %v1363
    %v1365 = vpop.xlane.xlu0 %1364
    %v1366 = vsel %vm53, %v1362, 0.0
    %1367 = vadd.xlane.f32.xlu0 %v1366
    %v1368 = vpop.xlane.xlu0 %1367
    %v1369 = vmul.f32 %v1365, %v60
    %v1370 = vmul.f32 %v1368, %v60
    %v1371 = vadd.f32 %v1369, 1e-05
    %v1372 = vadd.f32 %v1370, 1e-05
    %v1373 = vrsqrt.pop %v1371
    %v1374 = vrsqrt.pop %v1372
    %v1375 = vmul.f32 %v1359, %v1373
    %v1376 = vmul.f32 %v1360, %v1374
    %v1377 = vlaneseq
    %v1378 = vshrl.u32 %v1377, 7
    %v1379 = vsub.s32 0, %v1378
    %v1380 = vrot.slane %v49, %v1379
    %v1381 = vmul.f32 %v1375, %v1380
    %v1382 = vmul.f32 %v1376, %v1380
    %v1383 = vlaneseq
    %v1384 = vshrl.u32 %v1383, 7
    %v1385 = vsub.s32 0, %v1384
    %v1386 = vrot.slane %v50, %v1385
    %v1387 = vadd.f32 %v1381, %v1386
    %v1388 = vadd.f32 %v1382, %v1386
    %v1389 = vld [vmem:[%s5] sm:$0xff]
    %v1390 = vld [vmem:[%s5 + $0x8] sm:$0xff]
    %v1391 = vld [vmem:[%s5 + $0x10] sm:$0xff]
    %v1392 = vld [vmem:[%s5 + $0x18] sm:$0xff]
    %v1393 = vld [vmem:[%s6] sm:$0x1]
    %v1395 = vlaneseq
    %v1396 = vshrl.u32 %v1395, 7
    %v1397 = vsub.s32 0, %v1396
    %v1398 = vrot.slane %v1393, %v1397
    %v1401 = vsel %vm53, %v1387, 0
    %v1404 = vsel %vm53, %v1388, 0
    %1406 = vmatprep.subr.mxu0 0.0
    %1407 = vmatpush1.msra.mxu0 %v1389
    %1408 = vmatprep.subr.mxu0 0.0
    %1409 = vmatpush1.msra.mxu0 %v1390
    %1410 = vmatprep.subr.mxu0 0.0
    %1411 = vmatpush1.msra.mxu0 %v1391
    %1412 = vmatprep.subr.mxu0 0.0
    %1413 = vmatpush1.msra.mxu0 %v1392
    %1414 = vmatprep.subr.mxu0 0.0
    %1415 = vmatpush1.msra.mxu0 0.0
    %1416 = vmatprep.subr.mxu0 0.0
    %1417 = vmatpush1.msra.mxu0 0.0
    %1418 = vmatprep.subr.mxu0 0.0
    %1419 = vmatpush1.msra.mxu0 0.0
    %1420 = vmatprep.subr.mxu0 0.0
    %1421 = vmatpush1.msra.mxu0 0.0
    %1422 = vmatprep.subr.mxu0 0.0
    %1423 = vmatpush1.msra.mxu0 0.0
    %1424 = vmatprep.subr.mxu0 0.0
    %1425 = vmatpush1.msra.mxu0 0.0
    %1426 = vmatprep.subr.mxu0 0.0
    %1427 = vmatpush1.msra.mxu0 0.0
    %1428 = vmatprep.subr.mxu0 0.0
    %1429 = vmatpush1.msra.mxu0 0.0
    %1430 = vmatprep.subr.mxu0 0.0
    %1431 = vmatpush1.msra.mxu0 0.0
    %1432 = vmatprep.subr.mxu0 0.0
    %1433 = vmatpush1.msra.mxu0 0.0
    %1434 = vmatprep.subr.mxu0 0.0
    %1435 = vmatpush1.msra.mxu0 0.0
    %1436 = vmatprep.subr.mxu0 0.0
    %1437 = vmatpush1.msra.mxu0 0.0
    %1438 = vmatprep.subr.mxu0 0.0
    %1439 = vmatpush1.msra.mxu0 0.0
    %1440 = vmatprep.subr.mxu0 0.0
    %1441 = vmatpush1.msra.mxu0 0.0
    %1442 = vmatprep.subr.mxu0 0.0
    %1443 = vmatpush1.msra.mxu0 0.0
    %1444 = vmatprep.subr.mxu0 0.0
    %1445 = vmatpush1.msra.mxu0 0.0
    %1446 = vmatprep.subr.mxu0 0.0
    %1447 = vmatpush1.msra.mxu0 0.0
    %1448 = vmatprep.subr.mxu0 0.0
    %1449 = vmatpush1.msra.mxu0 0.0
    %1450 = vmatprep.subr.mxu0 0.0
    %1451 = vmatpush1.msra.mxu0 0.0
    %1452 = vmatprep.subr.mxu0 0.0
    %1453 = vmatpush1.msra.mxu0 0.0
    %1454 = vmatprep.subr.mxu0 0.0
    %1455 = vmatpush1.msra.mxu0 0.0
    %1456 = vmatprep.subr.mxu0 0.0
    %1457 = vmatpush1.msra.mxu0 0.0
    %1458 = vmatprep.subr.mxu0 0.0
    %1459 = vmatpush1.msra.mxu0 0.0
    %1460 = vmatprep.subr.mxu0 0.0
    %1461 = vmatpush1.msra.mxu0 0.0
    %1462 = vmatprep.subr.mxu0 0.0
    %1463 = vmatpush1.msra.mxu0 0.0
    %1464 = vmatprep.subr.mxu0 0.0
    %1465 = vmatpush1.msra.mxu0 0.0
    %1466 = vmatprep.subr.mxu0 0.0
    %1467 = vmatpush1.msra.mxu0 0.0
    %1468 = vmatprep.subr.mxu0 0.0
    %1469 = vmatpush1.msra.mxu0 0.0
    %1470 = vmatprep.mubr.f32.mxu0 0.0
    %1471 = vmatmul.mubr.f32.gmra.mrb[0].mxu0 %v1401
    %v1472 = vpop.f32.mrb[0].mxu0
    %v1473 = vadd.f32 %v1398, %v1472
    %v1474 = vpop.f32.mrb[0].mxu0
    %1475 = vmatprep.mubr.f32.mxu0 0.0
    %1476 = vmatmul.mubr.f32.gmra.mrb[0].mxu0 %v1404
    %v1477 = vpop.f32.mrb[0].mxu0
    %v1478 = vadd.f32 %v1398, %v1477
    %v1479 = vpop.f32.mrb[0].mxu0
    %1480 = vdwg.mxu0
    %v1481 = vmax.f32 %v1473, 0.0
    %v1482 = vmax.f32 %v1478, 0.0
    %v1483 = vld [vmem:[%s7] sm:$0xff]
    %v1484 = vld [vmem:[%s7 + $0x8] sm:$0xff]
    %v1485 = vld [vmem:[%s7 + $0x10] sm:$0xff]
    %v1486 = vld [vmem:[%s7 + $0x18] sm:$0xff]
    %v1487 = vld [vmem:[%s7 + $0x20] sm:$0xff]
    %v1488 = vld [vmem:[%s7 + $0x28] sm:$0xff]
    %v1489 = vld [vmem:[%s7 + $0x30] sm:$0xff]
    %v1490 = vld [vmem:[%s7 + $0x38] sm:$0xff]
    %vm1491 = vcmask 523264
    %v1493 = vsel %vm1491, %v1481, 0
    %v1496 = vsel %vm1491, %v1482, 0
    %1498 = vmatprep.subr.mxu0 0.0
    %1499 = vmatpush1.msra.mxu0 %v1483
    %1500 = vmatprep.subr.mxu0 0.0
    %1501 = vmatpush1.msra.mxu0 %v1484
    %1502 = vmatprep.subr.mxu0 0.0
    %1503 = vmatpush1.msra.mxu0 %v1485
    %1504 = vmatprep.subr.mxu0 0.0
    %1505 = vmatpush1.msra.mxu0 %v1486
    %1506 = vmatprep.subr.mxu0 0.0
    %1507 = vmatpush1.msra.mxu0 %v1487
    %1508 = vmatprep.subr.mxu0 0.0
    %1509 = vmatpush1.msra.mxu0 %v1488
    %1510 = vmatprep.subr.mxu0 0.0
    %1511 = vmatpush1.msra.mxu0 %v1489
    %1512 = vmatprep.subr.mxu0 0.0
    %1513 = vmatpush1.msra.mxu0 %v1490
    %1514 = vmatprep.subr.mxu0 0.0
    %1515 = vmatpush1.msra.mxu0 0.0
    %1516 = vmatprep.subr.mxu0 0.0
    %1517 = vmatpush1.msra.mxu0 0.0
    %1518 = vmatprep.subr.mxu0 0.0
    %1519 = vmatpush1.msra.mxu0 0.0
    %1520 = vmatprep.subr.mxu0 0.0
    %1521 = vmatpush1.msra.mxu0 0.0
    %1522 = vmatprep.subr.mxu0 0.0
    %1523 = vmatpush1.msra.mxu0 0.0
    %1524 = vmatprep.subr.mxu0 0.0
    %1525 = vmatpush1.msra.mxu0 0.0
    %1526 = vmatprep.subr.mxu0 0.0
    %1527 = vmatpush1.msra.mxu0 0.0
    %1528 = vmatprep.subr.mxu0 0.0
    %1529 = vmatpush1.msra.mxu0 0.0
    %1530 = vmatprep.subr.mxu0 0.0
    %1531 = vmatpush1.msra.mxu0 0.0
    %1532 = vmatprep.subr.mxu0 0.0
    %1533 = vmatpush1.msra.mxu0 0.0
    %1534 = vmatprep.subr.mxu0 0.0
    %1535 = vmatpush1.msra.mxu0 0.0
    %1536 = vmatprep.subr.mxu0 0.0
    %1537 = vmatpush1.msra.mxu0 0.0
    %1538 = vmatprep.subr.mxu0 0.0
    %1539 = vmatpush1.msra.mxu0 0.0
    %1540 = vmatprep.subr.mxu0 0.0
    %1541 = vmatpush1.msra.mxu0 0.0
    %1542 = vmatprep.subr.mxu0 0.0
    %1543 = vmatpush1.msra.mxu0 0.0
    %1544 = vmatprep.subr.mxu0 0.0
    %1545 = vmatpush1.msra.mxu0 0.0
    %1546 = vmatprep.subr.mxu0 0.0
    %1547 = vmatpush1.msra.mxu0 0.0
    %1548 = vmatprep.subr.mxu0 0.0
    %1549 = vmatpush1.msra.mxu0 0.0
    %1550 = vmatprep.subr.mxu0 0.0
    %1551 = vmatpush1.msra.mxu0 0.0
    %1552 = vmatprep.subr.mxu0 0.0
    %1553 = vmatpush1.msra.mxu0 0.0
    %1554 = vmatprep.subr.mxu0 0.0
    %1555 = vmatpush1.msra.mxu0 0.0
    %1556 = vmatprep.subr.mxu0 0.0
    %1557 = vmatpush1.msra.mxu0 0.0
    %1558 = vmatprep.subr.mxu0 0.0
    %1559 = vmatpush1.msra.mxu0 0.0
    %1560 = vmatprep.subr.mxu0 0.0
    %1561 = vmatpush1.msra.mxu0 0.0
    %1562 = vmatprep.mubr.f32.mxu0 0.0
    %1563 = vmatmul.mubr.f32.gmra.mrb[0].mxu0 %v1493
    %v1564 = vpop.f32.mrb[0].mxu0
    %v1565 = vadd.f32 0.0, %v1564
    %v1566 = vpop.f32.mrb[0].mxu0
    %1567 = vmatprep.mubr.f32.mxu0 0.0
    %1568 = vmatmul.mubr.f32.gmra.mrb[0].mxu0 %v1496
    %v1569 = vpop.f32.mrb[0].mxu0
    %v1570 = vadd.f32 0.0, %v1569
    %v1571 = vpop.f32.mrb[0].mxu0
    %1572 = vdwg.mxu0
    %v1573 = vadd.f32 %v1349, %v1565
    %v1574 = vadd.f32 %v1350, %v1570
    %v1575 = vlaneseq
    %v1576 = vshrl.u32 %v1575, 7
    %v1577 = vsub.s32 0, %v1576
    %v1578 = vrot.slane %v51, %v1577
    %v1579 = vadd.f32 %v1573, %v1578
    %v1580 = vadd.f32 %v1574, %v1578
    %1581 = vst.msk [vmem:[#allocation2] sm:$0xff] %vm53, %v1579
    %1582 = vst.msk [vmem:[#allocation2 + $0x8] sm:$0xff] %vm53, %v1580
    %v1583 = vlaneseq
    %v1584 = vand.u32 %v1583, 127
    %v1585 = vld [vmem:[%s9] sm:$0xff]
    %v1586 = vld [vmem:[%s9 + $0x8] sm:$0xff]
    %v1587 = vld [vmem:[%s9 + $0x10] sm:$0xff]
    %v1588 = vld [vmem:[%s9 + $0x18] sm:$0xff]
    %v1589 = vld [vmem:[%s9 + $0x20] sm:$0xff]
    %v1590 = vld [vmem:[%s9 + $0x28] sm:$0xff]
    %v1591 = vld [vmem:[%s9 + $0x30] sm:$0xff]
    %v1592 = vld [vmem:[%s9 + $0x38] sm:$0xff]
    %1593 = vset.pattern.permute.xlu0 0
    %1594 = vperm.xlu0 %1593, %v1585
    %v1595 = vpop.permute.xlu0 %1594
    %1596 = vset.pattern.permute.xlu0 0
    %1597 = vperm.xlu0 %1596, %v1586
    %v1598 = vpop.permute.xlu0 %1597
    %1599 = vset.pattern.permute.xlu0 0
    %1600 = vperm.xlu0 %1599, %v1587
    %v1601 = vpop.permute.xlu0 %1600
    %1602 = vset.pattern.permute.xlu0 0
    %1603 = vperm.xlu0 %1602, %v1588
    %v1604 = vpop.permute.xlu0 %1603
    %1605 = vset.pattern.permute.xlu0 0
    %1606 = vperm.xlu0 %1605, %v1589
    %v1607 = vpop.permute.xlu0 %1606
    %1608 = vset.pattern.permute.xlu0 0
    %1609 = vperm.xlu0 %1608, %v1590
    %v1610 = vpop.permute.xlu0 %1609
    %1611 = vset.pattern.permute.xlu0 0
    %1612 = vperm.xlu0 %1611, %v1591
    %v1613 = vpop.permute.xlu0 %1612
    %1614 = vset.pattern.permute.xlu0 0
    %1615 = vperm.xlu0 %1614, %v1592
    %v1616 = vpop.permute.xlu0 %1615
    %vm1617 = vcmp.eq.s32.totalorder %v1595, %v1584
    %vm1618 = vcmp.eq.s32.totalorder %v1598, %v1584
    %vm1619 = vcmp.eq.s32.totalorder %v1601, %v1584
    %vm1620 = vcmp.eq.s32.totalorder %v1604, %v1584
    %vm1621 = vcmp.eq.s32.totalorder %v1607, %v1584
    %vm1622 = vcmp.eq.s32.totalorder %v1610, %v1584
    %vm1623 = vcmp.eq.s32.totalorder %v1613, %v1584
    %vm1624 = vcmp.eq.s32.totalorder %v1616, %v1584
    %v1625 = vsel %vm1617, 1, 0
    %v1626 = vsel %vm1618, 1, 0
    %v1627 = vsel %vm1619, 1, 0
    %v1628 = vsel %vm1620, 1, 0
    %v1629 = vsel %vm1621, 1, 0
    %v1630 = vsel %vm1622, 1, 0
    %v1631 = vsel %vm1623, 1, 0
    %v1632 = vsel %vm1624, 1, 0
    %v1633 = vcvt.s32.f32 %v1625
    %v1634 = vcvt.s32.f32 %v1626
    %v1635 = vcvt.s32.f32 %v1627
    %v1636 = vcvt.s32.f32 %v1628
    %v1637 = vcvt.s32.f32 %v1629
    %v1638 = vcvt.s32.f32 %v1630
    %v1639 = vcvt.s32.f32 %v1631
    %v1640 = vcvt.s32.f32 %v1632
    %v1641 = vld [vmem:[%s10] sm:$0xff]
    %v1642 = vld [vmem:[%s10 + $0x8] sm:$0xff]
    %v1643 = vld [vmem:[%s10 + $0x10] sm:$0xff]
    %v1644 = vld [vmem:[%s10 + $0x18] sm:$0xff]
    %v1645 = vld [vmem:[%s10 + $0x20] sm:$0xff]
    %v1646 = vld [vmem:[%s10 + $0x28] sm:$0xff]
    %v1647 = vld [vmem:[%s10 + $0x30] sm:$0xff]
    %v1648 = vld [vmem:[%s10 + $0x38] sm:$0xff]
    %v1650 = vsel %vm281, %v1633, 0
    %v1653 = vsel %vm281, %v1634, 0
    %v1656 = vsel %vm281, %v1635, 0
    %v1659 = vsel %vm281, %v1636, 0
    %v1662 = vsel %vm281, %v1637, 0
    %v1665 = vsel %vm281, %v1638, 0
    %v1668 = vsel %vm281, %v1639, 0
    %v1671 = vsel %vm281, %v1640, 0
    %1673 = vmatprep.subr.mxu0 0.0
    %1674 = vmatpush1.msra.mxu0 %v1579
    %1675 = vmatprep.subr.mxu0 0.0
    %1676 = vmatpush1.msra.mxu0 %v1580
    %1677 = vmatprep.subr.mxu0 0.0
    %1678 = vmatpush1.msra.mxu0 0.0
    %1679 = vmatprep.subr.mxu0 0.0
    %1680 = vmatpush1.msra.mxu0 0.0
    %1681 = vmatprep.subr.mxu0 0.0
    %1682 = vmatpush1.msra.mxu0 0.0
    %1683 = vmatprep.subr.mxu0 0.0
    %1684 = vmatpush1.msra.mxu0 0.0
    %1685 = vmatprep.subr.mxu0 0.0
    %1686 = vmatpush1.msra.mxu0 0.0
    %1687 = vmatprep.subr.mxu0 0.0
    %1688 = vmatpush1.msra.mxu0 0.0
    %1689 = vmatprep.subr.mxu0 0.0
    %1690 = vmatpush1.msra.mxu0 0.0
    %1691 = vmatprep.subr.mxu0 0.0
    %1692 = vmatpush1.msra.mxu0 0.0
    %1693 = vmatprep.subr.mxu0 0.0
    %1694 = vmatpush1.msra.mxu0 0.0
    %1695 = vmatprep.subr.mxu0 0.0
    %1696 = vmatpush1.msra.mxu0 0.0
    %1697 = vmatprep.subr.mxu0 0.0
    %1698 = vmatpush1.msra.mxu0 0.0
    %1699 = vmatprep.subr.mxu0 0.0
    %1700 = vmatpush1.msra.mxu0 0.0
    %1701 = vmatprep.subr.mxu0 0.0
    %1702 = vmatpush1.msra.mxu0 0.0
    %1703 = vmatprep.subr.mxu0 0.0
    %1704 = vmatpush1.msra.mxu0 0.0
    %1705 = vmatprep.subr.mxu0 0.0
    %1706 = vmatpush1.msra.mxu0 0.0
    %1707 = vmatprep.subr.mxu0 0.0
    %1708 = vmatpush1.msra.mxu0 0.0
    %1709 = vmatprep.subr.mxu0 0.0
    %1710 = vmatpush1.msra.mxu0 0.0
    %1711 = vmatprep.subr.mxu0 0.0
    %1712 = vmatpush1.msra.mxu0 0.0
    %1713 = vmatprep.subr.mxu0 0.0
    %1714 = vmatpush1.msra.mxu0 0.0
    %1715 = vmatprep.subr.mxu0 0.0
    %1716 = vmatpush1.msra.mxu0 0.0
    %1717 = vmatprep.subr.mxu0 0.0
    %1718 = vmatpush1.msra.mxu0 0.0
    %1719 = vmatprep.subr.mxu0 0.0
    %1720 = vmatpush1.msra.mxu0 0.0
    %1721 = vmatprep.subr.mxu0 0.0
    %1722 = vmatpush1.msra.mxu0 0.0
    %1723 = vmatprep.subr.mxu0 0.0
    %1724 = vmatpush1.msra.mxu0 0.0
    %1725 = vmatprep.subr.mxu0 0.0
    %1726 = vmatpush1.msra.mxu0 0.0
    %1727 = vmatprep.subr.mxu0 0.0
    %1728 = vmatpush1.msra.mxu0 0.0
    %1729 = vmatprep.subr.mxu0 0.0
    %1730 = vmatpush1.msra.mxu0 0.0
    %1731 = vmatprep.subr.mxu0 0.0
    %1732 = vmatpush1.msra.mxu0 0.0
    %1733 = vmatprep.subr.mxu0 0.0
    %1734 = vmatpush1.msra.mxu0 0.0
    %1735 = vmatprep.subr.mxu0 0.0
    %1736 = vmatpush1.msra.mxu0 0.0
    %1737 = vmatprep.mubr.f32.mxu0 0.0
    %1738 = vmatmul.mubr.f32.gmra.mrb[0].mxu0 %v1650
    %v1739 = vpop.f32.mrb[0].mxu0
    %v1740 = vadd.f32 %v1641, %v1739
    %v1741 = vpop.f32.mrb[0].mxu0
    %1742 = vmatprep.mubr.f32.mxu0 0.0
    %1743 = vmatmul.mubr.f32.gmra.mrb[0].mxu0 %v1653
    %v1744 = vpop.f32.mrb[0].mxu0
    %v1745 = vadd.f32 %v1642, %v1744
    %v1746 = vpop.f32.mrb[0].mxu0
    %1747 = vmatprep.mubr.f32.mxu0 0.0
    %1748 = vmatmul.mubr.f32.gmra.mrb[0].mxu0 %v1656
    %v1749 = vpop.f32.mrb[0].mxu0
    %v1750 = vadd.f32 %v1643, %v1749
    %v1751 = vpop.f32.mrb[0].mxu0
    %1752 = vmatprep.mubr.f32.mxu0 0.0
    %1753 = vmatmul.mubr.f32.gmra.mrb[0].mxu0 %v1659
    %v1754 = vpop.f32.mrb[0].mxu0
    %v1755 = vadd.f32 %v1644, %v1754
    %v1756 = vpop.f32.mrb[0].mxu0
    %1757 = vmatprep.mubr.f32.mxu0 0.0
    %1758 = vmatmul.mubr.f32.gmra.mrb[0].mxu0 %v1662
    %v1759 = vpop.f32.mrb[0].mxu0
    %v1760 = vadd.f32 %v1645, %v1759
    %v1761 = vpop.f32.mrb[0].mxu0
    %1762 = vmatprep.mubr.f32.mxu0 0.0
    %1763 = vmatmul.mubr.f32.gmra.mrb[0].mxu0 %v1665
    %v1764 = vpop.f32.mrb[0].mxu0
    %v1765 = vadd.f32 %v1646, %v1764
    %v1766 = vpop.f32.mrb[0].mxu0
    %1767 = vmatprep.mubr.f32.mxu0 0.0
    %1768 = vmatmul.mubr.f32.gmra.mrb[0].mxu0 %v1668
    %v1769 = vpop.f32.mrb[0].mxu0
    %v1770 = vadd.f32 %v1647, %v1769
    %v1771 = vpop.f32.mrb[0].mxu0
    %1772 = vmatprep.mubr.f32.mxu0 0.0
    %1773 = vmatmul.mubr.f32.gmra.mrb[0].mxu0 %v1671
    %v1774 = vpop.f32.mrb[0].mxu0
    %v1775 = vadd.f32 %v1648, %v1774
    %v1776 = vpop.f32.mrb[0].mxu0
    %1777 = vdwg.mxu0
    %v1778 = vlaneseq
    %v1779 = vshrl.u32 %v1778, 7
    %v1780 = vadd.s32 %v1779, 8
    %v1781 = vmul.u32 %v1779, 4
    %v1782 = vmul.u32 %v1780, 4
    %vm1783 = vcmp.ge.s32.totalorder %v1584, %v1781
    %vm1784 = vcmp.ge.s32.totalorder %v1584, %v1782
    %v1785 = vadd.s32 %v1779, 1
    %v1786 = vadd.s32 %v1780, 1
    %v1787 = vmul.u32 %v1785, 4
    %v1788 = vmul.u32 %v1786, 4
    %vm1789 = vcmp.lt.s32.totalorder %v1584, %v1787
    %vm1790 = vcmp.lt.s32.totalorder %v1584, %v1788
    %vm1791 = vmand %vm1783, %vm1789
    %vm1792 = vmand %vm1784, %vm1790
    %v1793 = vsel %vm1791, 0.25, 0.0
    %v1794 = vsel %vm1792, 0.25, 0.0
    %v1795 = vld [vmem:[%s11] sm:$0xff]
    %v1796 = vld [vmem:[%s11 + $0x8] sm:$0xff]
    %1798 = vset.pattern.permute.xlu0 0
    %1799 = vperm.xlu0 %1798, %v1795
    %v1800 = vpop.permute.xlu0 %1799
    %1803 = vset.pattern.permute.xlu0 0
    %1804 = vperm.xlu0 %1803, %v1796
    %v1805 = vpop.permute.xlu0 %1804
    %v1807 = vmul.f32 %v1793, %v1800
    %v1808 = vmul.f32 %v1794, %v1805
    %v1810 = vsel %vm1491, %v1807, 0
    %v1813 = vsel %vm1491, %v1808, 0
    %1815 = vmatprep.subr.mxu0 0.0
    %1816 = vmatpush1.msra.mxu0 %v1740
    %1817 = vmatprep.subr.mxu0 0.0
    %1818 = vmatpush1.msra.mxu0 %v1745
    %1819 = vmatprep.subr.mxu0 0.0
    %1820 = vmatpush1.msra.mxu0 %v1750
    %1821 = vmatprep.subr.mxu0 0.0
    %1822 = vmatpush1.msra.mxu0 %v1755
    %1823 = vmatprep.subr.mxu0 0.0
    %1824 = vmatpush1.msra.mxu0 %v1760
    %1825 = vmatprep.subr.mxu0 0.0
    %1826 = vmatpush1.msra.mxu0 %v1765
    %1827 = vmatprep.subr.mxu0 0.0
    %1828 = vmatpush1.msra.mxu0 %v1770
    %1829 = vmatprep.subr.mxu0 0.0
    %1830 = vmatpush1.msra.mxu0 %v1775
    %1831 = vmatprep.subr.mxu0 0.0
    %1832 = vmatpush1.msra.mxu0 0.0
    %1833 = vmatprep.subr.mxu0 0.0
    %1834 = vmatpush1.msra.mxu0 0.0
    %1835 = vmatprep.subr.mxu0 0.0
    %1836 = vmatpush1.msra.mxu0 0.0
    %1837 = vmatprep.subr.mxu0 0.0
    %1838 = vmatpush1.msra.mxu0 0.0
    %1839 = vmatprep.subr.mxu0 0.0
    %1840 = vmatpush1.msra.mxu0 0.0
    %1841 = vmatprep.subr.mxu0 0.0
    %1842 = vmatpush1.msra.mxu0 0.0
    %1843 = vmatprep.subr.mxu0 0.0
    %1844 = vmatpush1.msra.mxu0 0.0
    %1845 = vmatprep.subr.mxu0 0.0
    %1846 = vmatpush1.msra.mxu0 0.0
    %1847 = vmatprep.subr.mxu0 0.0
    %1848 = vmatpush1.msra.mxu0 0.0
    %1849 = vmatprep.subr.mxu0 0.0
    %1850 = vmatpush1.msra.mxu0 0.0
    %1851 = vmatprep.subr.mxu0 0.0
    %1852 = vmatpush1.msra.mxu0 0.0
    %1853 = vmatprep.subr.mxu0 0.0
    %1854 = vmatpush1.msra.mxu0 0.0
    %1855 = vmatprep.subr.mxu0 0.0
    %1856 = vmatpush1.msra.mxu0 0.0
    %1857 = vmatprep.subr.mxu0 0.0
    %1858 = vmatpush1.msra.mxu0 0.0
    %1859 = vmatprep.subr.mxu0 0.0
    %1860 = vmatpush1.msra.mxu0 0.0
    %1861 = vmatprep.subr.mxu0 0.0
    %1862 = vmatpush1.msra.mxu0 0.0
    %1863 = vmatprep.subr.mxu0 0.0
    %1864 = vmatpush1.msra.mxu0 0.0
    %1865 = vmatprep.subr.mxu0 0.0
    %1866 = vmatpush1.msra.mxu0 0.0
    %1867 = vmatprep.subr.mxu0 0.0
    %1868 = vmatpush1.msra.mxu0 0.0
    %1869 = vmatprep.subr.mxu0 0.0
    %1870 = vmatpush1.msra.mxu0 0.0
    %1871 = vmatprep.subr.mxu0 0.0
    %1872 = vmatpush1.msra.mxu0 0.0
    %1873 = vmatprep.subr.mxu0 0.0
    %1874 = vmatpush1.msra.mxu0 0.0
    %1875 = vmatprep.subr.mxu0 0.0
    %1876 = vmatpush1.msra.mxu0 0.0
    %1877 = vmatprep.subr.mxu0 0.0
    %1878 = vmatpush1.msra.mxu0 0.0
    %1879 = vmatprep.mubr.f32.mxu0 0.0
    %1880 = vmatmul.mubr.f32.gmra.mrb[0].mxu0 %v1810
    %v1881 = vpop.f32.mrb[0].mxu0
    %v1882 = vadd.f32 0.0, %v1881
    %v1883 = vpop.f32.mrb[0].mxu0
    %1884 = vmatprep.mubr.f32.mxu0 0.0
    %1885 = vmatmul.mubr.f32.gmra.mrb[0].mxu0 %v1813
    %v1886 = vpop.f32.mrb[0].mxu0
    %v1887 = vadd.f32 0.0, %v1886
    %v1888 = vpop.f32.mrb[0].mxu0
    %1889 = vdwg.mxu0
    %v1890 = vld [vmem:[%s8] sm:$0xff]
    %v1891 = vld [vmem:[%s8 + $0x8] sm:$0xff]
    %v1892 = vld [vmem:[%s8 + $0x10] sm:$0xff]
    %v1893 = vld [vmem:[%s8 + $0x18] sm:$0xff]
    %v1894 = vlaneseq
    %v1895 = vshrl.u32 %v1894, 7
    %v1896 = vsub.s32 0, %v1895
    %v1897 = vrot.slane %v52, %v1896
    %v1899 = vsel %vm53, %v1882, 0
    %v1902 = vsel %vm53, %v1887, 0
    %1904 = vmatprep.subr.mxu0 0.0
    %1905 = vmatpush1.msra.mxu0 %v1890
    %1906 = vmatprep.subr.mxu0 0.0
    %1907 = vmatpush1.msra.mxu0 %v1891
    %1908 = vmatprep.subr.mxu0 0.0
    %1909 = vmatpush1.msra.mxu0 %v1892
    %1910 = vmatprep.subr.mxu0 0.0
    %1911 = vmatpush1.msra.mxu0 %v1893
    %1912 = vmatprep.subr.mxu0 0.0
    %1913 = vmatpush1.msra.mxu0 0.0
    %1914 = vmatprep.subr.mxu0 0.0
    %1915 = vmatpush1.msra.mxu0 0.0
    %1916 = vmatprep.subr.mxu0 0.0
    %1917 = vmatpush1.msra.mxu0 0.0
    %1918 = vmatprep.subr.mxu0 0.0
    %1919 = vmatpush1.msra.mxu0 0.0
    %1920 = vmatprep.subr.mxu0 0.0
    %1921 = vmatpush1.msra.mxu0 0.0
    %1922 = vmatprep.subr.mxu0 0.0
    %1923 = vmatpush1.msra.mxu0 0.0
    %1924 = vmatprep.subr.mxu0 0.0
    %1925 = vmatpush1.msra.mxu0 0.0
    %1926 = vmatprep.subr.mxu0 0.0
    %1927 = vmatpush1.msra.mxu0 0.0
    %1928 = vmatprep.subr.mxu0 0.0
    %1929 = vmatpush1.msra.mxu0 0.0
    %1930 = vmatprep.subr.mxu0 0.0
    %1931 = vmatpush1.msra.mxu0 0.0
    %1932 = vmatprep.subr.mxu0 0.0
    %1933 = vmatpush1.msra.mxu0 0.0
    %1934 = vmatprep.subr.mxu0 0.0
    %1935 = vmatpush1.msra.mxu0 0.0
    %1936 = vmatprep.subr.mxu0 0.0
    %1937 = vmatpush1.msra.mxu0 0.0
    %1938 = vmatprep.subr.mxu0 0.0
    %1939 = vmatpush1.msra.mxu0 0.0
    %1940 = vmatprep.subr.mxu0 0.0
    %1941 = vmatpush1.msra.mxu0 0.0
    %1942 = vmatprep.subr.mxu0 0.0
    %1943 = vmatpush1.msra.mxu0 0.0
    %1944 = vmatprep.subr.mxu0 0.0
    %1945 = vmatpush1.msra.mxu0 0.0
    %1946 = vmatprep.subr.mxu0 0.0
    %1947 = vmatpush1.msra.mxu0 0.0
    %1948 = vmatprep.subr.mxu0 0.0
    %1949 = vmatpush1.msra.mxu0 0.0
    %1950 = vmatprep.subr.mxu0 0.0
    %1951 = vmatpush1.msra.mxu0 0.0
    %1952 = vmatprep.subr.mxu0 0.0
    %1953 = vmatpush1.msra.mxu0 0.0
    %1954 = vmatprep.subr.mxu0 0.0
    %1955 = vmatpush1.msra.mxu0 0.0
    %1956 = vmatprep.subr.mxu0 0.0
    %1957 = vmatpush1.msra.mxu0 0.0
    %1958 = vmatprep.subr.mxu0 0.0
    %1959 = vmatpush1.msra.mxu0 0.0
    %1960 = vmatprep.subr.mxu0 0.0
    %1961 = vmatpush1.msra.mxu0 0.0
    %1962 = vmatprep.subr.mxu0 0.0
    %1963 = vmatpush1.msra.mxu0 0.0
    %1964 = vmatprep.subr.mxu0 0.0
    %1965 = vmatpush1.msra.mxu0 0.0
    %1966 = vmatprep.subr.mxu0 0.0
    %1967 = vmatpush1.msra.mxu0 0.0
    %1968 = vmatprep.mubr.f32.mxu0 0.0
    %1969 = vmatmul.mubr.f32.gmra.mrb[0].mxu0 %v1899
    %v1970 = vpop.f32.mrb[0].mxu0
    %v1971 = vadd.f32 %v1897, %v1970
    %v1972 = vpop.f32.mrb[0].mxu0
    %1973 = vmatprep.mubr.f32.mxu0 0.0
    %1974 = vmatmul.mubr.f32.gmra.mrb[0].mxu0 %v1902
    %v1975 = vpop.f32.mrb[0].mxu0
    %v1976 = vadd.f32 %v1897, %v1975
    %v1977 = vpop.f32.mrb[0].mxu0
    %1978 = vdwg.mxu0
    %1979 = vst.msk [vmem:[#allocation4] sm:$0xff] %vm53, %v1971
    %1980 = vst.msk [vmem:[#allocation4 + $0x8] sm:$0xff] %vm53, %v1976
    // Predicated region
    $region50: #{_forward_impl.1} parent=1 // pred_check
      _
    $region51: #{_forward_impl.1} parent=1 // pred_check_branch
      %1982 = sbr.rel (0) target = $region53
    $region52: #{_forward_impl.1} parent=1 // pred_region
      %s1984 = ssub.s32 256, 256
      %1985 = vsyncadd [#allocation3], %s1984
      %s1986 = sshll.u32 [#allocation2], 4
      %s1987 = int_to_ptr.vmem [resolvable:$true] %s1986
      %1992 = dma.vmem_to_hbm [thread:$0]  %s1987, 256, %s12, [#allocation3], 128, 128, 8
    $region53: #{_forward_impl.1} parent=1 // pred_fallthru
      _
    // Predicated region
    $region54: #{_forward_impl.1} parent=1 // pred_check
      _
    $region55: #{_forward_impl.1} parent=1 // pred_check_branch
      %1994 = sbr.rel (0) target = $region57
    $region56: #{_forward_impl.1} parent=1 // pred_region
      %s1996 = ssub.s32 256, 256
      %1997 = vsyncadd [#allocation5], %s1996
      %s1998 = sshll.u32 [#allocation4], 4
      %s1999 = int_to_ptr.vmem [resolvable:$true] %s1998
      %2004 = dma.vmem_to_hbm [thread:$0]  %s1999, 256, %s13, [#allocation5], 128, 128, 8
    $region57: #{_forward_impl.1} parent=1 // pred_fallthru
      _
    // Predicated region
    $region58: #{_forward_impl.1} parent=1 // pred_check
      _
    $region59: #{_forward_impl.1} parent=1 // pred_check_branch
      %2006 = sbr.rel (0) target = $region61
    $region60: #{_forward_impl.1} parent=1 // pred_region
      %2007 = dma.done [#allocation3], 256
    $region61: #{_forward_impl.1} parent=1 // pred_fallthru
      _
    // Predicated region
    $region62: #{_forward_impl.1} parent=1 // pred_check
      _
    $region63: #{_forward_impl.1} parent=1 // pred_check_branch
      %2009 = sbr.rel (0) target = $region65
    $region64: #{_forward_impl.1} parent=1 // pred_region
      %2010 = dma.done [#allocation5], 256
    $region65: #{_forward_impl.1} parent=1 // pred_fallthru
      _
    %2011 = vsyncpa [#allocation3], 1
    %2012 = vsyncpa [#allocation5], 1

</llo_original>
